<compile_context>
chip_gen: v7x
topology: tpu7x:2x2x1
jax: 0.10.0
libtpu: 0.0.40
codegen_flags: <defaults>
</compile_context>

<pallas_src>
import jax
import jax.numpy as jnp
import numpy as np
from jax import lax
from jax.experimental import pallas as pl
from jax.experimental.pallas import tpu as pltpu


def _full_spec(shape):
    # single grid point -> block == full array
    return pl.BlockSpec(shape, lambda i: (0,) * len(shape))


def drqn_kernel(x_ref, h0_ref, wih0_ref, wih_ref, bias_ref, whh_ref,
                wq_ref, bq_ref, out_ref, hout_ref, seq_ref):
    """Multi-layer Elman RNN (tanh) + linear Q decoder.

    x_ref:    (T*Bp, D)   flat time-major inputs (row t*Bp + b)
    h0_ref:   (L, Bp, H)  initial hidden state
    wih0_ref: (D, H)      layer-0 input weights (transposed)
    wih_ref:  (L, H, H)   layer>=1 input weights (transposed; slot 0 unused)
    bias_ref: (L, 1, H)   combined b_ih + b_hh
    whh_ref:  (L, H, H)   hidden weights (transposed)
    wq_ref:   (H, R)      decoder weights (transposed)
    bq_ref:   (1, R)
    out_ref:  (T*Bp, R)   flat Q values
    hout_ref: (L, Bp, H)  final hidden state
    seq_ref:  (T*Bp, H)   VMEM scratch: current layer pre-acts / outputs
    """
    num_layers = h0_ref.shape[0]
    b_pad = h0_ref.shape[1]
    seq_len = seq_ref.shape[0] // b_pad

    for layer in range(num_layers):          # static Python loop over layers
        # ---- non-recurrent input projection, hoisted out of the timestep
        #      loop: one whole-sequence GEMM + combined bias ----
        if layer == 0:
            pre_all = jnp.dot(x_ref[...], wih0_ref[...],
                              preferred_element_type=jnp.float32)
        else:
            pre_all = jnp.dot(seq_ref[...], wih_ref[layer],
                              preferred_element_type=jnp.float32)
        seq_ref[...] = pre_all + bias_ref[layer]

        # ---- hoisted h-invariant loads (no per-step VMEM re-reads) ----
        whh_l = whh_ref[layer]               # (H, H)
        h_init = h0_ref[layer]               # (Bp, H)

        def step(t, h, whh_l=whh_l):
            row = pl.multiple_of(t * b_pad, b_pad)
            pre = seq_ref[pl.ds(row, b_pad), :] + jnp.dot(
                h, whh_l, preferred_element_type=jnp.float32)
            h_new = jnp.tanh(pre)
            seq_ref[pl.ds(row, b_pad), :] = h_new
            return h_new

        # T is small & static -> fully unroll for cross-step scheduling.
        h_final = lax.fori_loop(0, seq_len, step, h_init, unroll=True)
        hout_ref[layer] = h_final.astype(hout_ref.dtype)

    # ---- Q decoder over all timesteps of the top layer: single MXU GEMM ----
    q = jnp.dot(seq_ref[...], wq_ref[...], preferred_element_type=jnp.float32)
    out_ref[...] = (q + bq_ref[...]).astype(out_ref.dtype)


def drqn_forward(inputs, hidden_state, params):
    """inputs: (B, T, D) batch-first.  hidden_state: (L, B, H)."""
    B, T, D = inputs.shape
    L, _, H = hidden_state.shape
    R = params["w_q"].shape[0]

    # Pad batch to a sublane multiple so every tile in the kernel is dense.
    B_pad = ((B + 7) // 8) * 8
    pad_b = B_pad - B

    x_tm = jnp.transpose(inputs, (1, 0, 2))                     # (T, B, D)
    if pad_b:
        x_tm = jnp.pad(x_tm, ((0, 0), (0, pad_b), (0, 0)))
        h0 = jnp.pad(hidden_state, ((0, 0), (0, pad_b), (0, 0)))
    else:
        h0 = hidden_state
    x_flat = x_tm.reshape(T * B_pad, D)                         # (T*Bp, D)

    wih0_t = params["w_ih0"].T                                  # (D, H)
    wih_t = jnp.transpose(params["w_ih"], (0, 2, 1))            # (L, H, H)
    whh_t = jnp.transpose(params["w_hh"], (0, 2, 1))            # (L, H, H)
    bias = (params["b_ih"] + params["b_hh"]).reshape(L, 1, H)   # combined
    wq_t = params["w_q"].T                                      # (H, R)
    bq = params["b_q"].reshape(1, R)

    out_flat, h_out = pl.pallas_call(
        drqn_kernel,
        grid=(1,),
        in_specs=[
            _full_spec((T * B_pad, D)),
            _full_spec((L, B_pad, H)),
            _full_spec((D, H)),
            _full_spec((L, H, H)),
            _full_spec((L, 1, H)),
            _full_spec((L, H, H)),
            _full_spec((H, R)),
            _full_spec((1, R)),
        ],
        out_specs=(
            _full_spec((T * B_pad, R)),
            _full_spec((L, B_pad, H)),
        ),
        out_shape=(
            jax.ShapeDtypeStruct((T * B_pad, R), jnp.float32),
            jax.ShapeDtypeStruct((L, B_pad, H), jnp.float32),
        ),
        scratch_shapes=[pltpu.VMEM((T * B_pad, H), jnp.float32)],
        compiler_params=pltpu.CompilerParams(
            dimension_semantics=("arbitrary",)),
    )(x_flat, h0, wih0_t, wih_t, bias, whh_t, wq_t, bq)

    out = out_flat.reshape(T, B_pad, R)[:, :B, :]               # drop batch pad
    out = jnp.transpose(out, (1, 0, 2))                         # (B, T, R)
    return out, h_out[:, :B, :]


def drqn_forward_ref(inputs, hidden_state, params):
    """Pure-JAX reference mirroring torch nn.RNN(batch_first=True) + Linear."""
    B, T, D = inputs.shape
    L, _, H = hidden_state.shape
    layer_in = inputs
    finals = []
    for layer in range(L):
        w_ih = params["w_ih0"] if layer == 0 else params["w_ih"][layer]
        w_hh = params["w_hh"][layer]
        b_ih = params["b_ih"][layer]
        b_hh = params["b_hh"][layer]
        h = hidden_state[layer]
        outs = []
        for t in range(T):
            xt = layer_in[:, t, :]
            h = jnp.tanh(xt @ w_ih.T + b_ih + h @ w_hh.T + b_hh)
            outs.append(h)
        layer_in = jnp.stack(outs, axis=1)
        finals.append(h)
    out = layer_in @ params["w_q"].T + params["b_q"]
    return out, jnp.stack(finals, axis=0)


def init_params(key, input_size, state_size, reward_space_size, num_layers):
    """Deterministic PyTorch-style uniform(-1/sqrt(H), 1/sqrt(H)) init."""
    keys = jax.random.split(key, 8)
    k_rnn = 1.0 / np.sqrt(state_size)
    k_lin = 1.0 / np.sqrt(state_size)
    u = lambda kk, shape, k: jax.random.uniform(kk, shape, jnp.float32, -k, k)
    params = {
        "w_ih0": u(keys[0], (state_size, input_size), k_rnn),
        # layer 0 slot is unused (kept so all layers index uniformly)
        "w_ih": u(keys[1], (num_layers, state_size, state_size), k_rnn),
        "w_hh": u(keys[2], (num_layers, state_size, state_size), k_rnn),
        "b_ih": u(keys[3], (num_layers, state_size), k_rnn),
        "b_hh": u(keys[4], (num_layers, state_size), k_rnn),
        "w_q": u(keys[5], (reward_space_size, state_size), k_lin),
        "b_q": u(keys[6], (reward_space_size,), k_lin),
    }
    return params


if __name__ == "__main__":
    # Small shapes consistent with the module's forward.
    batch, seq = 4, 8
    input_size, state_size, reward_space_size, num_layers = 16, 32, 8, 2

    key = jax.random.PRNGKey(0)
    k_params, k_x, k_h = jax.random.split(key, 3)

    params = init_params(k_params, input_size, state_size,
                         reward_space_size, num_layers)
    inputs = jax.random.normal(k_x, (batch, seq, input_size), jnp.float32)
    # init_hidden() would be zeros; use a random hidden state to exercise the
    # W_hh @ h0 path as well (forward accepts any hidden_state).
    hidden_state = 0.1 * jax.random.normal(
        k_h, (num_layers, batch, state_size), jnp.float32)

    out, h_out = drqn_forward(inputs, hidden_state, params)
    out = jax.block_until_ready(out)
    h_out = jax.block_until_ready(h_out)

    out_ref, h_ref = drqn_forward_ref(inputs, hidden_state, params)
    np.testing.assert_allclose(np.asarray(out), np.asarray(out_ref),
                               rtol=1e-5, atol=1e-5)
    np.testing.assert_allclose(np.asarray(h_out), np.asarray(h_ref),
                               rtol=1e-5, atol=1e-5)

    assert out.shape == (batch, seq, reward_space_size)
    assert h_out.shape == (num_layers, batch, state_size)
    print("KERNEL_OK")
</pallas_src>

<mosaic_0001>
module attributes {stable_mosaic.version = 11 : i64} {
  func.func @drqn_kernel(%arg0: i32, %arg1: memref<64x16xf32, #tpu.memory_space<vmem>>, %arg2: memref<2x8x32xf32, #tpu.memory_space<vmem>>, %arg3: memref<16x32xf32, #tpu.memory_space<vmem>>, %arg4: memref<2x32x32xf32, #tpu.memory_space<vmem>>, %arg5: memref<2x1x32xf32, #tpu.memory_space<vmem>>, %arg6: memref<2x32x32xf32, #tpu.memory_space<vmem>>, %arg7: memref<32x8xf32, #tpu.memory_space<vmem>>, %arg8: memref<1x8xf32, #tpu.memory_space<vmem>>, %arg9: memref<64x8xf32, #tpu.memory_space<vmem>>, %arg10: memref<2x8x32xf32, #tpu.memory_space<vmem>>, %arg11: memref<64x32xf32, #tpu.memory_space<vmem>>) attributes {dimension_semantics = [#tpu.dimension_semantics<arbitrary>], iteration_bounds = array<i64: 1>, scalar_prefetch = 0 : i64, scratch_operands = 1 : i64, tpu.core_type = #tpu.core_type<tc>, window_params = [{pipeline_mode = #tpu.pipeline_mode<synchronous>, transform_indices = @transform_0, window_bounds = array<i64: 64, 16>}, {pipeline_mode = #tpu.pipeline_mode<synchronous>, transform_indices = @transform_1, window_bounds = array<i64: 2, 8, 32>}, {pipeline_mode = #tpu.pipeline_mode<synchronous>, transform_indices = @transform_2, window_bounds = array<i64: 16, 32>}, {pipeline_mode = #tpu.pipeline_mode<synchronous>, transform_indices = @transform_3, window_bounds = array<i64: 2, 32, 32>}, {pipeline_mode = #tpu.pipeline_mode<synchronous>, transform_indices = @transform_4, window_bounds = array<i64: 2, 1, 32>}, {pipeline_mode = #tpu.pipeline_mode<synchronous>, transform_indices = @transform_5, window_bounds = array<i64: 2, 32, 32>}, {pipeline_mode = #tpu.pipeline_mode<synchronous>, transform_indices = @transform_6, window_bounds = array<i64: 32, 8>}, {pipeline_mode = #tpu.pipeline_mode<synchronous>, transform_indices = @transform_7, window_bounds = array<i64: 1, 8>}, {pipeline_mode = #tpu.pipeline_mode<synchronous>, transform_indices = @transform_8, window_bounds = array<i64: 64, 8>}, {pipeline_mode = #tpu.pipeline_mode<synchronous>, transform_indices = @transform_9, window_bounds = array<i64: 2, 8, 32>}]} {
    %c0 = arith.constant 0 : index
    %c0_0 = arith.constant 0 : index
    %0 = vector.load %arg1[%c0, %c0_0] : memref<64x16xf32, #tpu.memory_space<vmem>>, vector<64x16xf32>
    %c0_1 = arith.constant 0 : index
    %c0_2 = arith.constant 0 : index
    %1 = vector.load %arg3[%c0_1, %c0_2] : memref<16x32xf32, #tpu.memory_space<vmem>>, vector<16x32xf32>
    %cst = arith.constant dense<0.000000e+00> : vector<64x32xf32>
    %2 = tpu.matmul %0, %1, %cst {dimension_numbers = #tpu.dot_dimension_numbers<[1], [0], [0], [1], [0, 0, 1, 1], [], []>} : vector<64x16xf32>, vector<16x32xf32>, vector<64x32xf32> -> vector<64x32xf32>
    %c0_3 = arith.constant 0 : index
    %c0_4 = arith.constant 0 : index
    %c0_5 = arith.constant 0 : index
    %3 = vector.load %arg5[%c0_3, %c0_4, %c0_5] : memref<2x1x32xf32, #tpu.memory_space<vmem>>, vector<1x1x32xf32>
    %4 = vector.shape_cast %3 : vector<1x1x32xf32> to vector<1x32xf32>
    %5 = vector.broadcast %4 : vector<1x32xf32> to vector<64x32xf32>
    %6 = arith.addf %2, %5 : vector<64x32xf32>
    %c0_6 = arith.constant 0 : index
    %c0_7 = arith.constant 0 : index
    %7 = vector.load %arg11[%c0_6, %c0_7] : memref<64x32xf32, #tpu.memory_space<vmem>>, vector<64x32xf32>
    tpu.vector_store %arg11[%c0_6, %c0_7], %6 {strides = array<i32>} : memref<64x32xf32, #tpu.memory_space<vmem>>, vector<64x32xf32>,
    %c0_8 = arith.constant 0 : index
    %c0_9 = arith.constant 0 : index
    %c0_10 = arith.constant 0 : index
    %8 = vector.load %arg6[%c0_8, %c0_9, %c0_10] : memref<2x32x32xf32, #tpu.memory_space<vmem>>, vector<1x32x32xf32>
    %9 = vector.shape_cast %8 : vector<1x32x32xf32> to vector<32x32xf32>
    %c0_11 = arith.constant 0 : index
    %c0_12 = arith.constant 0 : index
    %c0_13 = arith.constant 0 : index
    %10 = vector.load %arg2[%c0_11, %c0_12, %c0_13] : memref<2x8x32xf32, #tpu.memory_space<vmem>>, vector<1x8x32xf32>
    %11 = vector.shape_cast %10 : vector<1x8x32xf32> to vector<8x32xf32>
    %c0_i32 = arith.constant 0 : i32
    %c8_i32 = arith.constant 8 : i32
    %12 = arith.muli %c0_i32, %c8_i32 : i32
    %13 = tpu.assume_multiple %12, 8 : i32
    %14 = arith.index_cast %13 : i32 to index
    %c0_14 = arith.constant 0 : index
    %15 = vector.load %arg11[%14, %c0_14] : memref<64x32xf32, #tpu.memory_space<vmem>>, vector<8x32xf32>
    %cst_15 = arith.constant dense<0.000000e+00> : vector<8x32xf32>
    %16 = tpu.matmul %11, %9, %cst_15 {dimension_numbers = #tpu.dot_dimension_numbers<[1], [0], [0], [1], [0, 0, 1, 1], [], []>} : vector<8x32xf32>, vector<32x32xf32>, vector<8x32xf32> -> vector<8x32xf32>
    %17 = arith.addf %15, %16 : vector<8x32xf32>
    %18 = math.tanh %17 : vector<8x32xf32>
    %19 = arith.index_cast %13 : i32 to index
    %c0_16 = arith.constant 0 : index
    %20 = vector.load %arg11[%19, %c0_16] : memref<64x32xf32, #tpu.memory_space<vmem>>, vector<8x32xf32>
    tpu.vector_store %arg11[%19, %c0_16], %18 {strides = array<i32>} : memref<64x32xf32, #tpu.memory_space<vmem>>, vector<8x32xf32>,
    %c1_i32 = arith.constant 1 : i32
    %c8_i32_17 = arith.constant 8 : i32
    %21 = arith.muli %c1_i32, %c8_i32_17 : i32
    %22 = tpu.assume_multiple %21, 8 : i32
    %23 = arith.index_cast %22 : i32 to index
    %c0_18 = arith.constant 0 : index
    %24 = vector.load %arg11[%23, %c0_18] : memref<64x32xf32, #tpu.memory_space<vmem>>, vector<8x32xf32>
    %cst_19 = arith.constant dense<0.000000e+00> : vector<8x32xf32>
    %25 = tpu.matmul %18, %9, %cst_19 {dimension_numbers = #tpu.dot_dimension_numbers<[1], [0], [0], [1], [0, 0, 1, 1], [], []>} : vector<8x32xf32>, vector<32x32xf32>, vector<8x32xf32> -> vector<8x32xf32>
    %26 = arith.addf %24, %25 : vector<8x32xf32>
    %27 = math.tanh %26 : vector<8x32xf32>
    %28 = arith.index_cast %22 : i32 to index
    %c0_20 = arith.constant 0 : index
    %29 = vector.load %arg11[%28, %c0_20] : memref<64x32xf32, #tpu.memory_space<vmem>>, vector<8x32xf32>
    tpu.vector_store %arg11[%28, %c0_20], %27 {strides = array<i32>} : memref<64x32xf32, #tpu.memory_space<vmem>>, vector<8x32xf32>,
    %c2_i32 = arith.constant 2 : i32
    %c8_i32_21 = arith.constant 8 : i32
    %30 = arith.muli %c2_i32, %c8_i32_21 : i32
    %31 = tpu.assume_multiple %30, 8 : i32
    %32 = arith.index_cast %31 : i32 to index
    %c0_22 = arith.constant 0 : index
    %33 = vector.load %arg11[%32, %c0_22] : memref<64x32xf32, #tpu.memory_space<vmem>>, vector<8x32xf32>
    %cst_23 = arith.constant dense<0.000000e+00> : vector<8x32xf32>
    %34 = tpu.matmul %27, %9, %cst_23 {dimension_numbers = #tpu.dot_dimension_numbers<[1], [0], [0], [1], [0, 0, 1, 1], [], []>} : vector<8x32xf32>, vector<32x32xf32>, vector<8x32xf32> -> vector<8x32xf32>
    %35 = arith.addf %33, %34 : vector<8x32xf32>
    %36 = math.tanh %35 : vector<8x32xf32>
    %37 = arith.index_cast %31 : i32 to index
    %c0_24 = arith.constant 0 : index
    %38 = vector.load %arg11[%37, %c0_24] : memref<64x32xf32, #tpu.memory_space<vmem>>, vector<8x32xf32>
    tpu.vector_store %arg11[%37, %c0_24], %36 {strides = array<i32>} : memref<64x32xf32, #tpu.memory_space<vmem>>, vector<8x32xf32>,
    %c3_i32 = arith.constant 3 : i32
    %c8_i32_25 = arith.constant 8 : i32
    %39 = arith.muli %c3_i32, %c8_i32_25 : i32
    %40 = tpu.assume_multiple %39, 8 : i32
    %41 = arith.index_cast %40 : i32 to index
    %c0_26 = arith.constant 0 : index
    %42 = vector.load %arg11[%41, %c0_26] : memref<64x32xf32, #tpu.memory_space<vmem>>, vector<8x32xf32>
    %cst_27 = arith.constant dense<0.000000e+00> : vector<8x32xf32>
    %43 = tpu.matmul %36, %9, %cst_27 {dimension_numbers = #tpu.dot_dimension_numbers<[1], [0], [0], [1], [0, 0, 1, 1], [], []>} : vector<8x32xf32>, vector<32x32xf32>, vector<8x32xf32> -> vector<8x32xf32>
    %44 = arith.addf %42, %43 : vector<8x32xf32>
    %45 = math.tanh %44 : vector<8x32xf32>
    %46 = arith.index_cast %40 : i32 to index
    %c0_28 = arith.constant 0 : index
    %47 = vector.load %arg11[%46, %c0_28] : memref<64x32xf32, #tpu.memory_space<vmem>>, vector<8x32xf32>
    tpu.vector_store %arg11[%46, %c0_28], %45 {strides = array<i32>} : memref<64x32xf32, #tpu.memory_space<vmem>>, vector<8x32xf32>,
    %c4_i32 = arith.constant 4 : i32
    %c8_i32_29 = arith.constant 8 : i32
    %48 = arith.muli %c4_i32, %c8_i32_29 : i32
    %49 = tpu.assume_multiple %48, 8 : i32
    %50 = arith.index_cast %49 : i32 to index
    %c0_30 = arith.constant 0 : index
    %51 = vector.load %arg11[%50, %c0_30] : memref<64x32xf32, #tpu.memory_space<vmem>>, vector<8x32xf32>
    %cst_31 = arith.constant dense<0.000000e+00> : vector<8x32xf32>
    %52 = tpu.matmul %45, %9, %cst_31 {dimension_numbers = #tpu.dot_dimension_numbers<[1], [0], [0], [1], [0, 0, 1, 1], [], []>} : vector<8x32xf32>, vector<32x32xf32>, vector<8x32xf32> -> vector<8x32xf32>
    %53 = arith.addf %51, %52 : vector<8x32xf32>
    %54 = math.tanh %53 : vector<8x32xf32>
    %55 = arith.index_cast %49 : i32 to index
    %c0_32 = arith.constant 0 : index
    %56 = vector.load %arg11[%55, %c0_32] : memref<64x32xf32, #tpu.memory_space<vmem>>, vector<8x32xf32>
    tpu.vector_store %arg11[%55, %c0_32], %54 {strides = array<i32>} : memref<64x32xf32, #tpu.memory_space<vmem>>, vector<8x32xf32>,
    %c5_i32 = arith.constant 5 : i32
    %c8_i32_33 = arith.constant 8 : i32
    %57 = arith.muli %c5_i32, %c8_i32_33 : i32
    %58 = tpu.assume_multiple %57, 8 : i32
    %59 = arith.index_cast %58 : i32 to index
    %c0_34 = arith.constant 0 : index
    %60 = vector.load %arg11[%59, %c0_34] : memref<64x32xf32, #tpu.memory_space<vmem>>, vector<8x32xf32>
    %cst_35 = arith.constant dense<0.000000e+00> : vector<8x32xf32>
    %61 = tpu.matmul %54, %9, %cst_35 {dimension_numbers = #tpu.dot_dimension_numbers<[1], [0], [0], [1], [0, 0, 1, 1], [], []>} : vector<8x32xf32>, vector<32x32xf32>, vector<8x32xf32> -> vector<8x32xf32>
    %62 = arith.addf %60, %61 : vector<8x32xf32>
    %63 = math.tanh %62 : vector<8x32xf32>
    %64 = arith.index_cast %58 : i32 to index
    %c0_36 = arith.constant 0 : index
    %65 = vector.load %arg11[%64, %c0_36] : memref<64x32xf32, #tpu.memory_space<vmem>>, vector<8x32xf32>
    tpu.vector_store %arg11[%64, %c0_36], %63 {strides = array<i32>} : memref<64x32xf32, #tpu.memory_space<vmem>>, vector<8x32xf32>,
    %c6_i32 = arith.constant 6 : i32
    %c8_i32_37 = arith.constant 8 : i32
    %66 = arith.muli %c6_i32, %c8_i32_37 : i32
    %67 = tpu.assume_multiple %66, 8 : i32
    %68 = arith.index_cast %67 : i32 to index
    %c0_38 = arith.constant 0 : index
    %69 = vector.load %arg11[%68, %c0_38] : memref<64x32xf32, #tpu.memory_space<vmem>>, vector<8x32xf32>
    %cst_39 = arith.constant dense<0.000000e+00> : vector<8x32xf32>
    %70 = tpu.matmul %63, %9, %cst_39 {dimension_numbers = #tpu.dot_dimension_numbers<[1], [0], [0], [1], [0, 0, 1, 1], [], []>} : vector<8x32xf32>, vector<32x32xf32>, vector<8x32xf32> -> vector<8x32xf32>
    %71 = arith.addf %69, %70 : vector<8x32xf32>
    %72 = math.tanh %71 : vector<8x32xf32>
    %73 = arith.index_cast %67 : i32 to index
    %c0_40 = arith.constant 0 : index
    %74 = vector.load %arg11[%73, %c0_40] : memref<64x32xf32, #tpu.memory_space<vmem>>, vector<8x32xf32>
    tpu.vector_store %arg11[%73, %c0_40], %72 {strides = array<i32>} : memref<64x32xf32, #tpu.memory_space<vmem>>, vector<8x32xf32>,
    %c7_i32 = arith.constant 7 : i32
    %c8_i32_41 = arith.constant 8 : i32
    %75 = arith.muli %c7_i32, %c8_i32_41 : i32
    %76 = tpu.assume_multiple %75, 8 : i32
    %77 = arith.index_cast %76 : i32 to index
    %c0_42 = arith.constant 0 : index
    %78 = vector.load %arg11[%77, %c0_42] : memref<64x32xf32, #tpu.memory_space<vmem>>, vector<8x32xf32>
    %cst_43 = arith.constant dense<0.000000e+00> : vector<8x32xf32>
    %79 = tpu.matmul %72, %9, %cst_43 {dimension_numbers = #tpu.dot_dimension_numbers<[1], [0], [0], [1], [0, 0, 1, 1], [], []>} : vector<8x32xf32>, vector<32x32xf32>, vector<8x32xf32> -> vector<8x32xf32>
    %80 = arith.addf %78, %79 : vector<8x32xf32>
    %81 = math.tanh %80 : vector<8x32xf32>
    %82 = arith.index_cast %76 : i32 to index
    %c0_44 = arith.constant 0 : index
    %83 = vector.load %arg11[%82, %c0_44] : memref<64x32xf32, #tpu.memory_space<vmem>>, vector<8x32xf32>
    tpu.vector_store %arg11[%82, %c0_44], %81 {strides = array<i32>} : memref<64x32xf32, #tpu.memory_space<vmem>>, vector<8x32xf32>,
    %c8_i32_45 = arith.constant 8 : i32
    %c0_46 = arith.constant 0 : index
    %c0_47 = arith.constant 0 : index
    %c0_48 = arith.constant 0 : index
    %84 = vector.load %arg10[%c0_46, %c0_47, %c0_48] : memref<2x8x32xf32, #tpu.memory_space<vmem>>, vector<1x8x32xf32>
    %85 = vector.shape_cast %84 : vector<1x8x32xf32> to vector<8x32xf32>
    %86 = vector.shape_cast %81 : vector<8x32xf32> to vector<1x8x32xf32>
    tpu.vector_store %arg10[%c0_46, %c0_47, %c0_48], %86 {strides = array<i32>} : memref<2x8x32xf32, #tpu.memory_space<vmem>>, vector<1x8x32xf32>,
    %c0_49 = arith.constant 0 : index
    %c0_50 = arith.constant 0 : index
    %87 = vector.load %arg11[%c0_49, %c0_50] : memref<64x32xf32, #tpu.memory_space<vmem>>, vector<64x32xf32>
    %c1 = arith.constant 1 : index
    %c0_51 = arith.constant 0 : index
    %c0_52 = arith.constant 0 : index
    %88 = vector.load %arg4[%c1, %c0_51, %c0_52] : memref<2x32x32xf32, #tpu.memory_space<vmem>>, vector<1x32x32xf32>
    %89 = vector.shape_cast %88 : vector<1x32x32xf32> to vector<32x32xf32>
    %cst_53 = arith.constant dense<0.000000e+00> : vector<64x32xf32>
    %90 = tpu.matmul %87, %89, %cst_53 {dimension_numbers = #tpu.dot_dimension_numbers<[1], [0], [0], [1], [0, 0, 1, 1], [], []>} : vector<64x32xf32>, vector<32x32xf32>, vector<64x32xf32> -> vector<64x32xf32>
    %c1_54 = arith.constant 1 : index
    %c0_55 = arith.constant 0 : index
    %c0_56 = arith.constant 0 : index
    %91 = vector.load %arg5[%c1_54, %c0_55, %c0_56] : memref<2x1x32xf32, #tpu.memory_space<vmem>>, vector<1x1x32xf32>
    %92 = vector.shape_cast %91 : vector<1x1x32xf32> to vector<1x32xf32>
    %93 = vector.broadcast %92 : vector<1x32xf32> to vector<64x32xf32>
    %94 = arith.addf %90, %93 : vector<64x32xf32>
    %c0_57 = arith.constant 0 : index
    %c0_58 = arith.constant 0 : index
    %95 = vector.load %arg11[%c0_57, %c0_58] : memref<64x32xf32, #tpu.memory_space<vmem>>, vector<64x32xf32>
    tpu.vector_store %arg11[%c0_57, %c0_58], %94 {strides = array<i32>} : memref<64x32xf32, #tpu.memory_space<vmem>>, vector<64x32xf32>,
    %c1_59 = arith.constant 1 : index
    %c0_60 = arith.constant 0 : index
    %c0_61 = arith.constant 0 : index
    %96 = vector.load %arg6[%c1_59, %c0_60, %c0_61] : memref<2x32x32xf32, #tpu.memory_space<vmem>>, vector<1x32x32xf32>
    %97 = vector.shape_cast %96 : vector<1x32x32xf32> to vector<32x32xf32>
    %c1_62 = arith.constant 1 : index
    %c0_63 = arith.constant 0 : index
    %c0_64 = arith.constant 0 : index
    %98 = vector.load %arg2[%c1_62, %c0_63, %c0_64] : memref<2x8x32xf32, #tpu.memory_space<vmem>>, vector<1x8x32xf32>
    %99 = vector.shape_cast %98 : vector<1x8x32xf32> to vector<8x32xf32>
    %c0_i32_65 = arith.constant 0 : i32
    %c8_i32_66 = arith.constant 8 : i32
    %100 = arith.muli %c0_i32_65, %c8_i32_66 : i32
    %101 = tpu.assume_multiple %100, 8 : i32
    %102 = arith.index_cast %101 : i32 to index
    %c0_67 = arith.constant 0 : index
    %103 = vector.load %arg11[%102, %c0_67] : memref<64x32xf32, #tpu.memory_space<vmem>>, vector<8x32xf32>
    %cst_68 = arith.constant dense<0.000000e+00> : vector<8x32xf32>
    %104 = tpu.matmul %99, %97, %cst_68 {dimension_numbers = #tpu.dot_dimension_numbers<[1], [0], [0], [1], [0, 0, 1, 1], [], []>} : vector<8x32xf32>, vector<32x32xf32>, vector<8x32xf32> -> vector<8x32xf32>
    %105 = arith.addf %103, %104 : vector<8x32xf32>
    %106 = math.tanh %105 : vector<8x32xf32>
    %107 = arith.index_cast %101 : i32 to index
    %c0_69 = arith.constant 0 : index
    %108 = vector.load %arg11[%107, %c0_69] : memref<64x32xf32, #tpu.memory_space<vmem>>, vector<8x32xf32>
    tpu.vector_store %arg11[%107, %c0_69], %106 {strides = array<i32>} : memref<64x32xf32, #tpu.memory_space<vmem>>, vector<8x32xf32>,
    %c1_i32_70 = arith.constant 1 : i32
    %c8_i32_71 = arith.constant 8 : i32
    %109 = arith.muli %c1_i32_70, %c8_i32_71 : i32
    %110 = tpu.assume_multiple %109, 8 : i32
    %111 = arith.index_cast %110 : i32 to index
    %c0_72 = arith.constant 0 : index
    %112 = vector.load %arg11[%111, %c0_72] : memref<64x32xf32, #tpu.memory_space<vmem>>, vector<8x32xf32>
    %cst_73 = arith.constant dense<0.000000e+00> : vector<8x32xf32>
    %113 = tpu.matmul %106, %97, %cst_73 {dimension_numbers = #tpu.dot_dimension_numbers<[1], [0], [0], [1], [0, 0, 1, 1], [], []>} : vector<8x32xf32>, vector<32x32xf32>, vector<8x32xf32> -> vector<8x32xf32>
    %114 = arith.addf %112, %113 : vector<8x32xf32>
    %115 = math.tanh %114 : vector<8x32xf32>
    %116 = arith.index_cast %110 : i32 to index
    %c0_74 = arith.constant 0 : index
    %117 = vector.load %arg11[%116, %c0_74] : memref<64x32xf32, #tpu.memory_space<vmem>>, vector<8x32xf32>
    tpu.vector_store %arg11[%116, %c0_74], %115 {strides = array<i32>} : memref<64x32xf32, #tpu.memory_space<vmem>>, vector<8x32xf32>,
    %c2_i32_75 = arith.constant 2 : i32
    %c8_i32_76 = arith.constant 8 : i32
    %118 = arith.muli %c2_i32_75, %c8_i32_76 : i32
    %119 = tpu.assume_multiple %118, 8 : i32
    %120 = arith.index_cast %119 : i32 to index
    %c0_77 = arith.constant 0 : index
    %121 = vector.load %arg11[%120, %c0_77] : memref<64x32xf32, #tpu.memory_space<vmem>>, vector<8x32xf32>
    %cst_78 = arith.constant dense<0.000000e+00> : vector<8x32xf32>
    %122 = tpu.matmul %115, %97, %cst_78 {dimension_numbers = #tpu.dot_dimension_numbers<[1], [0], [0], [1], [0, 0, 1, 1], [], []>} : vector<8x32xf32>, vector<32x32xf32>, vector<8x32xf32> -> vector<8x32xf32>
    %123 = arith.addf %121, %122 : vector<8x32xf32>
    %124 = math.tanh %123 : vector<8x32xf32>
    %125 = arith.index_cast %119 : i32 to index
    %c0_79 = arith.constant 0 : index
    %126 = vector.load %arg11[%125, %c0_79] : memref<64x32xf32, #tpu.memory_space<vmem>>, vector<8x32xf32>
    tpu.vector_store %arg11[%125, %c0_79], %124 {strides = array<i32>} : memref<64x32xf32, #tpu.memory_space<vmem>>, vector<8x32xf32>,
    %c3_i32_80 = arith.constant 3 : i32
    %c8_i32_81 = arith.constant 8 : i32
    %127 = arith.muli %c3_i32_80, %c8_i32_81 : i32
    %128 = tpu.assume_multiple %127, 8 : i32
    %129 = arith.index_cast %128 : i32 to index
    %c0_82 = arith.constant 0 : index
    %130 = vector.load %arg11[%129, %c0_82] : memref<64x32xf32, #tpu.memory_space<vmem>>, vector<8x32xf32>
    %cst_83 = arith.constant dense<0.000000e+00> : vector<8x32xf32>
    %131 = tpu.matmul %124, %97, %cst_83 {dimension_numbers = #tpu.dot_dimension_numbers<[1], [0], [0], [1], [0, 0, 1, 1], [], []>} : vector<8x32xf32>, vector<32x32xf32>, vector<8x32xf32> -> vector<8x32xf32>
    %132 = arith.addf %130, %131 : vector<8x32xf32>
    %133 = math.tanh %132 : vector<8x32xf32>
    %134 = arith.index_cast %128 : i32 to index
    %c0_84 = arith.constant 0 : index
    %135 = vector.load %arg11[%134, %c0_84] : memref<64x32xf32, #tpu.memory_space<vmem>>, vector<8x32xf32>
    tpu.vector_store %arg11[%134, %c0_84], %133 {strides = array<i32>} : memref<64x32xf32, #tpu.memory_space<vmem>>, vector<8x32xf32>,
    %c4_i32_85 = arith.constant 4 : i32
    %c8_i32_86 = arith.constant 8 : i32
    %136 = arith.muli %c4_i32_85, %c8_i32_86 : i32
    %137 = tpu.assume_multiple %136, 8 : i32
    %138 = arith.index_cast %137 : i32 to index
    %c0_87 = arith.constant 0 : index
    %139 = vector.load %arg11[%138, %c0_87] : memref<64x32xf32, #tpu.memory_space<vmem>>, vector<8x32xf32>
    %cst_88 = arith.constant dense<0.000000e+00> : vector<8x32xf32>
    %140 = tpu.matmul %133, %97, %cst_88 {dimension_numbers = #tpu.dot_dimension_numbers<[1], [0], [0], [1], [0, 0, 1, 1], [], []>} : vector<8x32xf32>, vector<32x32xf32>, vector<8x32xf32> -> vector<8x32xf32>
    %141 = arith.addf %139, %140 : vector<8x32xf32>
    %142 = math.tanh %141 : vector<8x32xf32>
    %143 = arith.index_cast %137 : i32 to index
    %c0_89 = arith.constant 0 : index
    %144 = vector.load %arg11[%143, %c0_89] : memref<64x32xf32, #tpu.memory_space<vmem>>, vector<8x32xf32>
    tpu.vector_store %arg11[%143, %c0_89], %142 {strides = array<i32>} : memref<64x32xf32, #tpu.memory_space<vmem>>, vector<8x32xf32>,
    %c5_i32_90 = arith.constant 5 : i32
    %c8_i32_91 = arith.constant 8 : i32
    %145 = arith.muli %c5_i32_90, %c8_i32_91 : i32
    %146 = tpu.assume_multiple %145, 8 : i32
    %147 = arith.index_cast %146 : i32 to index
    %c0_92 = arith.constant 0 : index
    %148 = vector.load %arg11[%147, %c0_92] : memref<64x32xf32, #tpu.memory_space<vmem>>, vector<8x32xf32>
    %cst_93 = arith.constant dense<0.000000e+00> : vector<8x32xf32>
    %149 = tpu.matmul %142, %97, %cst_93 {dimension_numbers = #tpu.dot_dimension_numbers<[1], [0], [0], [1], [0, 0, 1, 1], [], []>} : vector<8x32xf32>, vector<32x32xf32>, vector<8x32xf32> -> vector<8x32xf32>
    %150 = arith.addf %148, %149 : vector<8x32xf32>
    %151 = math.tanh %150 : vector<8x32xf32>
    %152 = arith.index_cast %146 : i32 to index
    %c0_94 = arith.constant 0 : index
    %153 = vector.load %arg11[%152, %c0_94] : memref<64x32xf32, #tpu.memory_space<vmem>>, vector<8x32xf32>
    tpu.vector_store %arg11[%152, %c0_94], %151 {strides = array<i32>} : memref<64x32xf32, #tpu.memory_space<vmem>>, vector<8x32xf32>,
    %c6_i32_95 = arith.constant 6 : i32
    %c8_i32_96 = arith.constant 8 : i32
    %154 = arith.muli %c6_i32_95, %c8_i32_96 : i32
    %155 = tpu.assume_multiple %154, 8 : i32
    %156 = arith.index_cast %155 : i32 to index
    %c0_97 = arith.constant 0 : index
    %157 = vector.load %arg11[%156, %c0_97] : memref<64x32xf32, #tpu.memory_space<vmem>>, vector<8x32xf32>
    %cst_98 = arith.constant dense<0.000000e+00> : vector<8x32xf32>
    %158 = tpu.matmul %151, %97, %cst_98 {dimension_numbers = #tpu.dot_dimension_numbers<[1], [0], [0], [1], [0, 0, 1, 1], [], []>} : vector<8x32xf32>, vector<32x32xf32>, vector<8x32xf32> -> vector<8x32xf32>
    %159 = arith.addf %157, %158 : vector<8x32xf32>
    %160 = math.tanh %159 : vector<8x32xf32>
    %161 = arith.index_cast %155 : i32 to index
    %c0_99 = arith.constant 0 : index
    %162 = vector.load %arg11[%161, %c0_99] : memref<64x32xf32, #tpu.memory_space<vmem>>, vector<8x32xf32>
    tpu.vector_store %arg11[%161, %c0_99], %160 {strides = array<i32>} : memref<64x32xf32, #tpu.memory_space<vmem>>, vector<8x32xf32>,
    %c7_i32_100 = arith.constant 7 : i32
    %c8_i32_101 = arith.constant 8 : i32
    %163 = arith.muli %c7_i32_100, %c8_i32_101 : i32
    %164 = tpu.assume_multiple %163, 8 : i32
    %165 = arith.index_cast %164 : i32 to index
    %c0_102 = arith.constant 0 : index
    %166 = vector.load %arg11[%165, %c0_102] : memref<64x32xf32, #tpu.memory_space<vmem>>, vector<8x32xf32>
    %cst_103 = arith.constant dense<0.000000e+00> : vector<8x32xf32>
    %167 = tpu.matmul %160, %97, %cst_103 {dimension_numbers = #tpu.dot_dimension_numbers<[1], [0], [0], [1], [0, 0, 1, 1], [], []>} : vector<8x32xf32>, vector<32x32xf32>, vector<8x32xf32> -> vector<8x32xf32>
    %168 = arith.addf %166, %167 : vector<8x32xf32>
    %169 = math.tanh %168 : vector<8x32xf32>
    %170 = arith.index_cast %164 : i32 to index
    %c0_104 = arith.constant 0 : index
    %171 = vector.load %arg11[%170, %c0_104] : memref<64x32xf32, #tpu.memory_space<vmem>>, vector<8x32xf32>
    tpu.vector_store %arg11[%170, %c0_104], %169 {strides = array<i32>} : memref<64x32xf32, #tpu.memory_space<vmem>>, vector<8x32xf32>,
    %c8_i32_105 = arith.constant 8 : i32
    %c1_106 = arith.constant 1 : index
    %c0_107 = arith.constant 0 : index
    %c0_108 = arith.constant 0 : index
    %172 = vector.load %arg10[%c1_106, %c0_107, %c0_108] : memref<2x8x32xf32, #tpu.memory_space<vmem>>, vector<1x8x32xf32>
    %173 = vector.shape_cast %172 : vector<1x8x32xf32> to vector<8x32xf32>
    %174 = vector.shape_cast %169 : vector<8x32xf32> to vector<1x8x32xf32>
    tpu.vector_store %arg10[%c1_106, %c0_107, %c0_108], %174 {strides = array<i32>} : memref<2x8x32xf32, #tpu.memory_space<vmem>>, vector<1x8x32xf32>,
    %c0_109 = arith.constant 0 : index
    %c0_110 = arith.constant 0 : index
    %175 = vector.load %arg11[%c0_109, %c0_110] : memref<64x32xf32, #tpu.memory_space<vmem>>, vector<64x32xf32>
    %c0_111 = arith.constant 0 : index
    %c0_112 = arith.constant 0 : index
    %176 = vector.load %arg7[%c0_111, %c0_112] : memref<32x8xf32, #tpu.memory_space<vmem>>, vector<32x8xf32>
    %cst_113 = arith.constant dense<0.000000e+00> : vector<64x8xf32>
    %177 = tpu.matmul %175, %176, %cst_113 {dimension_numbers = #tpu.dot_dimension_numbers<[1], [0], [0], [1], [0, 0, 1, 1], [], []>} : vector<64x32xf32>, vector<32x8xf32>, vector<64x8xf32> -> vector<64x8xf32>
    %c0_114 = arith.constant 0 : index
    %c0_115 = arith.constant 0 : index
    %178 = vector.load %arg8[%c0_114, %c0_115] : memref<1x8xf32, #tpu.memory_space<vmem>>, vector<1x8xf32>
    %179 = vector.broadcast %178 : vector<1x8xf32> to vector<64x8xf32>
    %180 = arith.addf %177, %179 : vector<64x8xf32>
    %c0_116 = arith.constant 0 : index
    %c0_117 = arith.constant 0 : index
    %181 = vector.load %arg9[%c0_116, %c0_117] : memref<64x8xf32, #tpu.memory_space<vmem>>, vector<64x8xf32>
    tpu.vector_store %arg9[%c0_116, %c0_117], %180 {strides = array<i32>} : memref<64x8xf32, #tpu.memory_space<vmem>>, vector<64x8xf32>,
    return
  }
  func.func @transform_0(%arg0: i32) -> (i32, i32) {
    %c0_i32 = arith.constant 0 : i32
    %c0_i32_0 = arith.constant 0 : i32
    %c0_i32_1 = arith.constant 0 : i32
    return %c0_i32, %c0_i32_0 : i32, i32
  }
  func.func @transform_1(%arg0: i32) -> (i32, i32, i32) {
    %c0_i32 = arith.constant 0 : i32
    %c0_i32_0 = arith.constant 0 : i32
    %c0_i32_1 = arith.constant 0 : i32
    %c0_i32_2 = arith.constant 0 : i32
    return %c0_i32, %c0_i32_0, %c0_i32_1 : i32, i32, i32
  }
  func.func @transform_2(%arg0: i32) -> (i32, i32) {
    %c0_i32 = arith.constant 0 : i32
    %c0_i32_0 = arith.constant 0 : i32
    %c0_i32_1 = arith.constant 0 : i32
    return %c0_i32, %c0_i32_0 : i32, i32
  }
  func.func @transform_3(%arg0: i32) -> (i32, i32, i32) {
    %c0_i32 = arith.constant 0 : i32
    %c0_i32_0 = arith.constant 0 : i32
    %c0_i32_1 = arith.constant 0 : i32
    %c0_i32_2 = arith.constant 0 : i32
    return %c0_i32, %c0_i32_0, %c0_i32_1 : i32, i32, i32
  }
  func.func @transform_4(%arg0: i32) -> (i32, i32, i32) {
    %c0_i32 = arith.constant 0 : i32
    %c0_i32_0 = arith.constant 0 : i32
    %c0_i32_1 = arith.constant 0 : i32
    %c0_i32_2 = arith.constant 0 : i32
    return %c0_i32, %c0_i32_0, %c0_i32_1 : i32, i32, i32
  }
  func.func @transform_5(%arg0: i32) -> (i32, i32, i32) {
    %c0_i32 = arith.constant 0 : i32
    %c0_i32_0 = arith.constant 0 : i32
    %c0_i32_1 = arith.constant 0 : i32
    %c0_i32_2 = arith.constant 0 : i32
    return %c0_i32, %c0_i32_0, %c0_i32_1 : i32, i32, i32
  }
  func.func @transform_6(%arg0: i32) -> (i32, i32) {
    %c0_i32 = arith.constant 0 : i32
    %c0_i32_0 = arith.constant 0 : i32
    %c0_i32_1 = arith.constant 0 : i32
    return %c0_i32, %c0_i32_0 : i32, i32
  }
  func.func @transform_7(%arg0: i32) -> (i32, i32) {
    %c0_i32 = arith.constant 0 : i32
    %c0_i32_0 = arith.constant 0 : i32
    %c0_i32_1 = arith.constant 0 : i32
    return %c0_i32, %c0_i32_0 : i32, i32
  }
  func.func @transform_8(%arg0: i32) -> (i32, i32) {
    %c0_i32 = arith.constant 0 : i32
    %c0_i32_0 = arith.constant 0 : i32
    %c0_i32_1 = arith.constant 0 : i32
    return %c0_i32, %c0_i32_0 : i32, i32
  }
  func.func @transform_9(%arg0: i32) -> (i32, i32, i32) {
    %c0_i32 = arith.constant 0 : i32
    %c0_i32_0 = arith.constant 0 : i32
    %c0_i32_1 = arith.constant 0 : i32
    %c0_i32_2 = arith.constant 0 : i32
    return %c0_i32, %c0_i32_0, %c0_i32_1 : i32, i32, i32
  }
}

</mosaic_0001>

<llo_original>
// kernel: tpu_custom_call.1
$region0: #{tpu_custom_call.1}
  #allocation0 [shape = 'u32[]', space=smem, size = 0x4, offset = 0x4, fixed_abs, tag = 'smem constant byte address 0x4 - core index']
  #allocation1 [shape = 'u32[144,128]{1,0:T(1,128)}', space=vmem, size = 0x12000, scoped, tag = 'internal scratch']
  #allocation2 [shape = 'f32[64,32]{1,0:T(8,128)}', space=vmem, size = 0x8000, scoped, tag = 'scratch operand']
  %s0 = inlined_call_operand.vmem [shape: f32[64,16], index: 0, kind: input, shape index: {}]
  %s1 = inlined_call_operand.hbm [shape: f32[2,8,32], index: 1, kind: input, shape index: {}]
  %s2 = inlined_call_operand.hbm [shape: f32[16,32], index: 2, kind: input, shape index: {}]
  %s3 = inlined_call_operand.vmem [shape: f32[2,32,32], index: 3, kind: input, shape index: {}]
  %s4 = inlined_call_operand.vmem [shape: f32[2,1,32], index: 4, kind: input, shape index: {}]
  %s5 = inlined_call_operand.vmem [shape: f32[2,32,32], index: 5, kind: input, shape index: {}]
  %s6 = inlined_call_operand.vmem [shape: f32[32,8], index: 6, kind: input, shape index: {}]
  %s7 = inlined_call_operand.vmem [shape: f32[1,8], index: 7, kind: input, shape index: {}]
  %s8 = inlined_call_operand.vmem [shape: f32[64,8], index: 8, kind: output, shape index: {0}]
  %s9 = inlined_call_operand.hbm [shape: f32[2,8,32], index: 9, kind: output, shape index: {1}]
  %10 = xla_tuple %s8, %s9
  %s11 = sld [smem:[#allocation0]]
  $region58: #{tpu_custom_call.1} parent=0
    _
  %s13 = ssub.s32 1, %s11
  %s14 = scalar_select 0, %s13, %s11
  $region1: #{tpu_custom_call.1} parent=0
    #allocation3 [shape = 'u8[8192]{0}', space=vmem, size = 0x2000, scoped, tag = 'input window, operand 1, single buffered']
    #allocation4 [shape = 's32[1]{0}', space=sflag, size = 0x4, scoped, tag = 'scoped memory for tpu_custom_call.1']
    #allocation5 [shape = 's32[1]{0}', space=sflag, size = 0x4, scoped, tag = 'scoped memory for tpu_custom_call.1']
    #allocation6 [shape = 'u8[8192]{0}', space=vmem, size = 0x2000, scoped, tag = 'input window, operand 2, single buffered']
    #allocation7 [shape = 's32[1]{0}', space=sflag, size = 0x4, scoped, tag = 'scoped memory for tpu_custom_call.1']
    #allocation8 [shape = 'u8[8192]{0}', space=vmem, size = 0x2000, scoped, tag = 'output window, operand 1, single buffered']
    %15 = vsyncpa [#allocation4], 0
    %16 = vsyncpa [#allocation7], 0
    %17 = vsyncpa [#allocation5], 0
    // Predicated region
    $region2: #{tpu_custom_call.1} parent=1 // pred_check
      _
    $region3: #{tpu_custom_call.1} parent=1 // pred_check_branch
      %19 = sbr.rel (0) target = $region5
    $region4: #{tpu_custom_call.1} parent=1 // pred_region
      _
    $region5: #{tpu_custom_call.1} parent=1 // pred_fallthru
      _
    // Predicated region
    $region6: #{tpu_custom_call.1} parent=1 // pred_check
      _
    $region7: #{tpu_custom_call.1} parent=1 // pred_check_branch
      %21 = sbr.rel (0) target = $region9
    $region8: #{tpu_custom_call.1} parent=1 // pred_region
      %s23 = ssub.s32 256, 256
      %24 = vsyncadd [#allocation4], %s23
      %s25 = sshll.u32 [#allocation3], 4
      %s26 = int_to_ptr.vmem [resolvable:$true] %s25
      %31 = dma.hbm_to_vmem [thread:$0]  %s1, 256, %s26, [#allocation4], 128, 128, 8
    $region9: #{tpu_custom_call.1} parent=1 // pred_fallthru
      _
    // Predicated region
    $region10: #{tpu_custom_call.1} parent=1 // pred_check
      _
    $region11: #{tpu_custom_call.1} parent=1 // pred_check_branch
      %33 = sbr.rel (0) target = $region13
    $region12: #{tpu_custom_call.1} parent=1 // pred_region
      %s35 = ssub.s32 256, 256
      %36 = vsyncadd [#allocation7], %s35
      %s37 = sshll.u32 [#allocation6], 4
      %s38 = int_to_ptr.vmem [resolvable:$true] %s37
      %43 = dma.hbm_to_vmem [thread:$0]  %s2, 256, %s38, [#allocation7], 128, 128, 8
    $region13: #{tpu_custom_call.1} parent=1 // pred_fallthru
      _
    // Predicated region
    $region14: #{tpu_custom_call.1} parent=1 // pred_check
      _
    $region15: #{tpu_custom_call.1} parent=1 // pred_check_branch
      %45 = sbr.rel (0) target = $region17
    $region16: #{tpu_custom_call.1} parent=1 // pred_region
      _
    $region17: #{tpu_custom_call.1} parent=1 // pred_fallthru
      _
    // Predicated region
    $region18: #{tpu_custom_call.1} parent=1 // pred_check
      _
    $region19: #{tpu_custom_call.1} parent=1 // pred_check_branch
      %47 = sbr.rel (0) target = $region21
    $region20: #{tpu_custom_call.1} parent=1 // pred_region
      _
    $region21: #{tpu_custom_call.1} parent=1 // pred_fallthru
      _
    // Predicated region
    $region22: #{tpu_custom_call.1} parent=1 // pred_check
      _
    $region23: #{tpu_custom_call.1} parent=1 // pred_check_branch
      %49 = sbr.rel (0) target = $region25
    $region24: #{tpu_custom_call.1} parent=1 // pred_region
      _
    $region25: #{tpu_custom_call.1} parent=1 // pred_fallthru
      _
    // Predicated region
    $region26: #{tpu_custom_call.1} parent=1 // pred_check
      _
    $region27: #{tpu_custom_call.1} parent=1 // pred_check_branch
      %51 = sbr.rel (0) target = $region29
    $region28: #{tpu_custom_call.1} parent=1 // pred_region
      _
    $region29: #{tpu_custom_call.1} parent=1 // pred_fallthru
      _
    // Predicated region
    $region30: #{tpu_custom_call.1} parent=1 // pred_check
      _
    $region31: #{tpu_custom_call.1} parent=1 // pred_check_branch
      %53 = sbr.rel (0) target = $region33
    $region32: #{tpu_custom_call.1} parent=1 // pred_region
      _
    $region33: #{tpu_custom_call.1} parent=1 // pred_fallthru
      _
    // Predicated region
    $region34: #{tpu_custom_call.1} parent=1 // pred_check
      _
    $region35: #{tpu_custom_call.1} parent=1 // pred_check_branch
      %55 = sbr.rel (0) target = $region37
    $region36: #{tpu_custom_call.1} parent=1 // pred_region
      %56 = dma.done [#allocation4], 256
    $region37: #{tpu_custom_call.1} parent=1 // pred_fallthru
      _
    // Predicated region
    $region38: #{tpu_custom_call.1} parent=1 // pred_check
      _
    $region39: #{tpu_custom_call.1} parent=1 // pred_check_branch
      %58 = sbr.rel (0) target = $region41
    $region40: #{tpu_custom_call.1} parent=1 // pred_region
      %59 = dma.done [#allocation7], 256
    $region41: #{tpu_custom_call.1} parent=1 // pred_fallthru
      _
    %v60 = vld [vmem:[%s0] sm:$0xff]
    %v61 = vld [vmem:[%s0 + $0x8] sm:$0xff]
    %v62 = vld [vmem:[%s0 + $0x10] sm:$0xff]
    %v63 = vld [vmem:[%s0 + $0x18] sm:$0xff]
    %v64 = vld [vmem:[%s0 + $0x20] sm:$0xff]
    %v65 = vld [vmem:[%s0 + $0x28] sm:$0xff]
    %v66 = vld [vmem:[%s0 + $0x30] sm:$0xff]
    %v67 = vld [vmem:[%s0 + $0x38] sm:$0xff]
    %v68 = vld [vmem:[#allocation6] sm:$0xff]
    %v69 = vld [vmem:[#allocation6 + $0x8] sm:$0xff]
    %v70 = vld [vmem:[%s4] sm:$0x1]
    %v72 = vlaneseq
    %v73 = vshrl.u32 %v72, 7
    %v74 = vsub.s32 0, %v73
    %v75 = vrot.slane %v70, %v74
    %vm77 = vcmask 130048
    %v79 = vsel %vm77, %v60, 0
    %v82 = vsel %vm77, %v61, 0
    %v85 = vsel %vm77, %v62, 0
    %v88 = vsel %vm77, %v63, 0
    %v91 = vsel %vm77, %v64, 0
    %v94 = vsel %vm77, %v65, 0
    %v97 = vsel %vm77, %v66, 0
    %v100 = vsel %vm77, %v67, 0
    %102 = vmatprep.subr.mxu0 0.0
    %103 = vmatpush1.msra.mxu0 %v68
    %104 = vmatprep.subr.mxu0 0.0
    %105 = vmatpush1.msra.mxu0 %v69
    %106 = vmatprep.subr.mxu0 0.0
    %107 = vmatpush1.msra.mxu0 0.0
    %108 = vmatprep.subr.mxu0 0.0
    %109 = vmatpush1.msra.mxu0 0.0
    %110 = vmatprep.subr.mxu0 0.0
    %111 = vmatpush1.msra.mxu0 0.0
    %112 = vmatprep.subr.mxu0 0.0
    %113 = vmatpush1.msra.mxu0 0.0
    %114 = vmatprep.subr.mxu0 0.0
    %115 = vmatpush1.msra.mxu0 0.0
    %116 = vmatprep.subr.mxu0 0.0
    %117 = vmatpush1.msra.mxu0 0.0
    %118 = vmatprep.subr.mxu0 0.0
    %119 = vmatpush1.msra.mxu0 0.0
    %120 = vmatprep.subr.mxu0 0.0
    %121 = vmatpush1.msra.mxu0 0.0
    %122 = vmatprep.subr.mxu0 0.0
    %123 = vmatpush1.msra.mxu0 0.0
    %124 = vmatprep.subr.mxu0 0.0
    %125 = vmatpush1.msra.mxu0 0.0
    %126 = vmatprep.subr.mxu0 0.0
    %127 = vmatpush1.msra.mxu0 0.0
    %128 = vmatprep.subr.mxu0 0.0
    %129 = vmatpush1.msra.mxu0 0.0
    %130 = vmatprep.subr.mxu0 0.0
    %131 = vmatpush1.msra.mxu0 0.0
    %132 = vmatprep.subr.mxu0 0.0
    %133 = vmatpush1.msra.mxu0 0.0
    %134 = vmatprep.subr.mxu0 0.0
    %135 = vmatpush1.msra.mxu0 0.0
    %136 = vmatprep.subr.mxu0 0.0
    %137 = vmatpush1.msra.mxu0 0.0
    %138 = vmatprep.subr.mxu0 0.0
    %139 = vmatpush1.msra.mxu0 0.0
    %140 = vmatprep.subr.mxu0 0.0
    %141 = vmatpush1.msra.mxu0 0.0
    %142 = vmatprep.subr.mxu0 0.0
    %143 = vmatpush1.msra.mxu0 0.0
    %144 = vmatprep.subr.mxu0 0.0
    %145 = vmatpush1.msra.mxu0 0.0
    %146 = vmatprep.subr.mxu0 0.0
    %147 = vmatpush1.msra.mxu0 0.0
    %148 = vmatprep.subr.mxu0 0.0
    %149 = vmatpush1.msra.mxu0 0.0
    %150 = vmatprep.subr.mxu0 0.0
    %151 = vmatpush1.msra.mxu0 0.0
    %152 = vmatprep.subr.mxu0 0.0
    %153 = vmatpush1.msra.mxu0 0.0
    %154 = vmatprep.subr.mxu0 0.0
    %155 = vmatpush1.msra.mxu0 0.0
    %156 = vmatprep.subr.mxu0 0.0
    %157 = vmatpush1.msra.mxu0 0.0
    %158 = vmatprep.subr.mxu0 0.0
    %159 = vmatpush1.msra.mxu0 0.0
    %160 = vmatprep.subr.mxu0 0.0
    %161 = vmatpush1.msra.mxu0 0.0
    %162 = vmatprep.subr.mxu0 0.0
    %163 = vmatpush1.msra.mxu0 0.0
    %164 = vmatprep.subr.mxu0 0.0
    %165 = vmatpush1.msra.mxu0 0.0
    %166 = vmatprep.mubr.f32.mxu0 0.0
    %167 = vmatmul.mubr.f32.gmra.mrb[0].mxu0 %v79
    %v168 = vpop.f32.mrb[0].mxu0
    %v169 = vadd.f32 %v75, %v168
    %v170 = vpop.f32.mrb[0].mxu0
    %171 = vmatprep.mubr.f32.mxu0 0.0
    %172 = vmatmul.mubr.f32.gmra.mrb[0].mxu0 %v82
    %v173 = vpop.f32.mrb[0].mxu0
    %v174 = vadd.f32 %v75, %v173
    %v175 = vpop.f32.mrb[0].mxu0
    %176 = vmatprep.mubr.f32.mxu0 0.0
    %177 = vmatmul.mubr.f32.gmra.mrb[0].mxu0 %v85
    %v178 = vpop.f32.mrb[0].mxu0
    %v179 = vadd.f32 %v75, %v178
    %v180 = vpop.f32.mrb[0].mxu0
    %181 = vmatprep.mubr.f32.mxu0 0.0
    %182 = vmatmul.mubr.f32.gmra.mrb[0].mxu0 %v88
    %v183 = vpop.f32.mrb[0].mxu0
    %v184 = vadd.f32 %v75, %v183
    %v185 = vpop.f32.mrb[0].mxu0
    %186 = vmatprep.mubr.f32.mxu0 0.0
    %187 = vmatmul.mubr.f32.gmra.mrb[0].mxu0 %v91
    %v188 = vpop.f32.mrb[0].mxu0
    %v189 = vadd.f32 %v75, %v188
    %v190 = vpop.f32.mrb[0].mxu0
    %191 = vmatprep.mubr.f32.mxu0 0.0
    %192 = vmatmul.mubr.f32.gmra.mrb[0].mxu0 %v94
    %v193 = vpop.f32.mrb[0].mxu0
    %v194 = vadd.f32 %v75, %v193
    %v195 = vpop.f32.mrb[0].mxu0
    %196 = vmatprep.mubr.f32.mxu0 0.0
    %197 = vmatmul.mubr.f32.gmra.mrb[0].mxu0 %v97
    %v198 = vpop.f32.mrb[0].mxu0
    %v199 = vadd.f32 %v75, %v198
    %v200 = vpop.f32.mrb[0].mxu0
    %201 = vmatprep.mubr.f32.mxu0 0.0
    %202 = vmatmul.mubr.f32.gmra.mrb[0].mxu0 %v100
    %v203 = vpop.f32.mrb[0].mxu0
    %v204 = vadd.f32 %v75, %v203
    %v205 = vpop.f32.mrb[0].mxu0
    %206 = vdwg.mxu0
    %vm207 = vcmask 261120
    %208 = vst.msk [vmem:[#allocation2] sm:$0xff] %vm207, %v169
    %209 = vst.msk [vmem:[#allocation2 + $0x8] sm:$0xff] %vm207, %v174
    %210 = vst.msk [vmem:[#allocation2 + $0x10] sm:$0xff] %vm207, %v179
    %211 = vst.msk [vmem:[#allocation2 + $0x18] sm:$0xff] %vm207, %v184
    %212 = vst.msk [vmem:[#allocation2 + $0x20] sm:$0xff] %vm207, %v189
    %213 = vst.msk [vmem:[#allocation2 + $0x28] sm:$0xff] %vm207, %v194
    %214 = vst.msk [vmem:[#allocation2 + $0x30] sm:$0xff] %vm207, %v199
    %215 = vst.msk [vmem:[#allocation2 + $0x38] sm:$0xff] %vm207, %v204
    %v216 = vld [vmem:[%s5] sm:$0xff]
    %v217 = vld [vmem:[%s5 + $0x8] sm:$0xff]
    %v218 = vld [vmem:[%s5 + $0x10] sm:$0xff]
    %v219 = vld [vmem:[%s5 + $0x18] sm:$0xff]
    %v220 = vld [vmem:[#allocation3] sm:$0xff]
    %v221 = vld [vmem:[#allocation2] sm:$0xff]
    %v223 = vsel %vm207, %v220, 0
    %225 = vmatprep.subr.mxu0 0.0
    %226 = vmatpush1.msra.mxu0 %v216
    %227 = vmatprep.subr.mxu0 0.0
    %228 = vmatpush1.msra.mxu0 %v217
    %229 = vmatprep.subr.mxu0 0.0
    %230 = vmatpush1.msra.mxu0 %v218
    %231 = vmatprep.subr.mxu0 0.0
    %232 = vmatpush1.msra.mxu0 %v219
    %233 = vmatprep.subr.mxu0 0.0
    %234 = vmatpush1.msra.mxu0 0.0
    %235 = vmatprep.subr.mxu0 0.0
    %236 = vmatpush1.msra.mxu0 0.0
    %237 = vmatprep.subr.mxu0 0.0
    %238 = vmatpush1.msra.mxu0 0.0
    %239 = vmatprep.subr.mxu0 0.0
    %240 = vmatpush1.msra.mxu0 0.0
    %241 = vmatprep.subr.mxu0 0.0
    %242 = vmatpush1.msra.mxu0 0.0
    %243 = vmatprep.subr.mxu0 0.0
    %244 = vmatpush1.msra.mxu0 0.0
    %245 = vmatprep.subr.mxu0 0.0
    %246 = vmatpush1.msra.mxu0 0.0
    %247 = vmatprep.subr.mxu0 0.0
    %248 = vmatpush1.msra.mxu0 0.0
    %249 = vmatprep.subr.mxu0 0.0
    %250 = vmatpush1.msra.mxu0 0.0
    %251 = vmatprep.subr.mxu0 0.0
    %252 = vmatpush1.msra.mxu0 0.0
    %253 = vmatprep.subr.mxu0 0.0
    %254 = vmatpush1.msra.mxu0 0.0
    %255 = vmatprep.subr.mxu0 0.0
    %256 = vmatpush1.msra.mxu0 0.0
    %257 = vmatprep.subr.mxu0 0.0
    %258 = vmatpush1.msra.mxu0 0.0
    %259 = vmatprep.subr.mxu0 0.0
    %260 = vmatpush1.msra.mxu0 0.0
    %261 = vmatprep.subr.mxu0 0.0
    %262 = vmatpush1.msra.mxu0 0.0
    %263 = vmatprep.subr.mxu0 0.0
    %264 = vmatpush1.msra.mxu0 0.0
    %265 = vmatprep.subr.mxu0 0.0
    %266 = vmatpush1.msra.mxu0 0.0
    %267 = vmatprep.subr.mxu0 0.0
    %268 = vmatpush1.msra.mxu0 0.0
    %269 = vmatprep.subr.mxu0 0.0
    %270 = vmatpush1.msra.mxu0 0.0
    %271 = vmatprep.subr.mxu0 0.0
    %272 = vmatpush1.msra.mxu0 0.0
    %273 = vmatprep.subr.mxu0 0.0
    %274 = vmatpush1.msra.mxu0 0.0
    %275 = vmatprep.subr.mxu0 0.0
    %276 = vmatpush1.msra.mxu0 0.0
    %277 = vmatprep.subr.mxu0 0.0
    %278 = vmatpush1.msra.mxu0 0.0
    %279 = vmatprep.subr.mxu0 0.0
    %280 = vmatpush1.msra.mxu0 0.0
    %281 = vmatprep.subr.mxu0 0.0
    %282 = vmatpush1.msra.mxu0 0.0
    %283 = vmatprep.subr.mxu0 0.0
    %284 = vmatpush1.msra.mxu0 0.0
    %285 = vmatprep.subr.mxu0 0.0
    %286 = vmatpush1.msra.mxu0 0.0
    %287 = vmatprep.subr.mxu0 0.0
    %288 = vmatpush1.msra.mxu0 0.0
    %289 = vmatprep.mubr.f32.mxu0 0.0
    %290 = vmatmul.mubr.f32.gmra.mrb[0].mxu0 %v223
    %v291 = vpop.f32.mrb[0].mxu0
    %v292 = vadd.f32 0.0, %v291
    %v293 = vpop.f32.mrb[0].mxu0
    %294 = vdwg.mxu0
    %v295 = vadd.f32 %v221, %v292
    %v296 = vtanh.pop %v295
    %297 = vst.msk [vmem:[#allocation2] sm:$0xff] %vm207, %v296
    %s298 = scalar_lea.vmem [#allocation2], 8
    %v299 = vld [vmem:[%s298] sm:$0xff]
    %v301 = vsel %vm207, %v296, 0
    %303 = vmatprep.subr.mxu0 0.0
    %304 = vmatpush1.msra.mxu0 %v216
    %305 = vmatprep.subr.mxu0 0.0
    %306 = vmatpush1.msra.mxu0 %v217
    %307 = vmatprep.subr.mxu0 0.0
    %308 = vmatpush1.msra.mxu0 %v218
    %309 = vmatprep.subr.mxu0 0.0
    %310 = vmatpush1.msra.mxu0 %v219
    %311 = vmatprep.subr.mxu0 0.0
    %312 = vmatpush1.msra.mxu0 0.0
    %313 = vmatprep.subr.mxu0 0.0
    %314 = vmatpush1.msra.mxu0 0.0
    %315 = vmatprep.subr.mxu0 0.0
    %316 = vmatpush1.msra.mxu0 0.0
    %317 = vmatprep.subr.mxu0 0.0
    %318 = vmatpush1.msra.mxu0 0.0
    %319 = vmatprep.subr.mxu0 0.0
    %320 = vmatpush1.msra.mxu0 0.0
    %321 = vmatprep.subr.mxu0 0.0
    %322 = vmatpush1.msra.mxu0 0.0
    %323 = vmatprep.subr.mxu0 0.0
    %324 = vmatpush1.msra.mxu0 0.0
    %325 = vmatprep.subr.mxu0 0.0
    %326 = vmatpush1.msra.mxu0 0.0
    %327 = vmatprep.subr.mxu0 0.0
    %328 = vmatpush1.msra.mxu0 0.0
    %329 = vmatprep.subr.mxu0 0.0
    %330 = vmatpush1.msra.mxu0 0.0
    %331 = vmatprep.subr.mxu0 0.0
    %332 = vmatpush1.msra.mxu0 0.0
    %333 = vmatprep.subr.mxu0 0.0
    %334 = vmatpush1.msra.mxu0 0.0
    %335 = vmatprep.subr.mxu0 0.0
    %336 = vmatpush1.msra.mxu0 0.0
    %337 = vmatprep.subr.mxu0 0.0
    %338 = vmatpush1.msra.mxu0 0.0
    %339 = vmatprep.subr.mxu0 0.0
    %340 = vmatpush1.msra.mxu0 0.0
    %341 = vmatprep.subr.mxu0 0.0
    %342 = vmatpush1.msra.mxu0 0.0
    %343 = vmatprep.subr.mxu0 0.0
    %344 = vmatpush1.msra.mxu0 0.0
    %345 = vmatprep.subr.mxu0 0.0
    %346 = vmatpush1.msra.mxu0 0.0
    %347 = vmatprep.subr.mxu0 0.0
    %348 = vmatpush1.msra.mxu0 0.0
    %349 = vmatprep.subr.mxu0 0.0
    %350 = vmatpush1.msra.mxu0 0.0
    %351 = vmatprep.subr.mxu0 0.0
    %352 = vmatpush1.msra.mxu0 0.0
    %353 = vmatprep.subr.mxu0 0.0
    %354 = vmatpush1.msra.mxu0 0.0
    %355 = vmatprep.subr.mxu0 0.0
    %356 = vmatpush1.msra.mxu0 0.0
    %357 = vmatprep.subr.mxu0 0.0
    %358 = vmatpush1.msra.mxu0 0.0
    %359 = vmatprep.subr.mxu0 0.0
    %360 = vmatpush1.msra.mxu0 0.0
    %361 = vmatprep.subr.mxu0 0.0
    %362 = vmatpush1.msra.mxu0 0.0
    %363 = vmatprep.subr.mxu0 0.0
    %364 = vmatpush1.msra.mxu0 0.0
    %365 = vmatprep.subr.mxu0 0.0
    %366 = vmatpush1.msra.mxu0 0.0
    %367 = vmatprep.mubr.f32.mxu0 0.0
    %368 = vmatmul.mubr.f32.gmra.mrb[0].mxu0 %v301
    %v369 = vpop.f32.mrb[0].mxu0
    %v370 = vadd.f32 0.0, %v369
    %v371 = vpop.f32.mrb[0].mxu0
    %372 = vdwg.mxu0
    %v373 = vadd.f32 %v299, %v370
    %v374 = vtanh.pop %v373
    %375 = vst.msk [vmem:[%s298] sm:$0xff] %vm207, %v374
    %s376 = scalar_lea.vmem [#allocation2], 16
    %v377 = vld [vmem:[%s376] sm:$0xff]
    %v379 = vsel %vm207, %v374, 0
    %381 = vmatprep.subr.mxu0 0.0
    %382 = vmatpush1.msra.mxu0 %v216
    %383 = vmatprep.subr.mxu0 0.0
    %384 = vmatpush1.msra.mxu0 %v217
    %385 = vmatprep.subr.mxu0 0.0
    %386 = vmatpush1.msra.mxu0 %v218
    %387 = vmatprep.subr.mxu0 0.0
    %388 = vmatpush1.msra.mxu0 %v219
    %389 = vmatprep.subr.mxu0 0.0
    %390 = vmatpush1.msra.mxu0 0.0
    %391 = vmatprep.subr.mxu0 0.0
    %392 = vmatpush1.msra.mxu0 0.0
    %393 = vmatprep.subr.mxu0 0.0
    %394 = vmatpush1.msra.mxu0 0.0
    %395 = vmatprep.subr.mxu0 0.0
    %396 = vmatpush1.msra.mxu0 0.0
    %397 = vmatprep.subr.mxu0 0.0
    %398 = vmatpush1.msra.mxu0 0.0
    %399 = vmatprep.subr.mxu0 0.0
    %400 = vmatpush1.msra.mxu0 0.0
    %401 = vmatprep.subr.mxu0 0.0
    %402 = vmatpush1.msra.mxu0 0.0
    %403 = vmatprep.subr.mxu0 0.0
    %404 = vmatpush1.msra.mxu0 0.0
    %405 = vmatprep.subr.mxu0 0.0
    %406 = vmatpush1.msra.mxu0 0.0
    %407 = vmatprep.subr.mxu0 0.0
    %408 = vmatpush1.msra.mxu0 0.0
    %409 = vmatprep.subr.mxu0 0.0
    %410 = vmatpush1.msra.mxu0 0.0
    %411 = vmatprep.subr.mxu0 0.0
    %412 = vmatpush1.msra.mxu0 0.0
    %413 = vmatprep.subr.mxu0 0.0
    %414 = vmatpush1.msra.mxu0 0.0
    %415 = vmatprep.subr.mxu0 0.0
    %416 = vmatpush1.msra.mxu0 0.0
    %417 = vmatprep.subr.mxu0 0.0
    %418 = vmatpush1.msra.mxu0 0.0
    %419 = vmatprep.subr.mxu0 0.0
    %420 = vmatpush1.msra.mxu0 0.0
    %421 = vmatprep.subr.mxu0 0.0
    %422 = vmatpush1.msra.mxu0 0.0
    %423 = vmatprep.subr.mxu0 0.0
    %424 = vmatpush1.msra.mxu0 0.0
    %425 = vmatprep.subr.mxu0 0.0
    %426 = vmatpush1.msra.mxu0 0.0
    %427 = vmatprep.subr.mxu0 0.0
    %428 = vmatpush1.msra.mxu0 0.0
    %429 = vmatprep.subr.mxu0 0.0
    %430 = vmatpush1.msra.mxu0 0.0
    %431 = vmatprep.subr.mxu0 0.0
    %432 = vmatpush1.msra.mxu0 0.0
    %433 = vmatprep.subr.mxu0 0.0
    %434 = vmatpush1.msra.mxu0 0.0
    %435 = vmatprep.subr.mxu0 0.0
    %436 = vmatpush1.msra.mxu0 0.0
    %437 = vmatprep.subr.mxu0 0.0
    %438 = vmatpush1.msra.mxu0 0.0
    %439 = vmatprep.subr.mxu0 0.0
    %440 = vmatpush1.msra.mxu0 0.0
    %441 = vmatprep.subr.mxu0 0.0
    %442 = vmatpush1.msra.mxu0 0.0
    %443 = vmatprep.subr.mxu0 0.0
    %444 = vmatpush1.msra.mxu0 0.0
    %445 = vmatprep.mubr.f32.mxu0 0.0
    %446 = vmatmul.mubr.f32.gmra.mrb[0].mxu0 %v379
    %v447 = vpop.f32.mrb[0].mxu0
    %v448 = vadd.f32 0.0, %v447
    %v449 = vpop.f32.mrb[0].mxu0
    %450 = vdwg.mxu0
    %v451 = vadd.f32 %v377, %v448
    %v452 = vtanh.pop %v451
    %453 = vst.msk [vmem:[%s376] sm:$0xff] %vm207, %v452
    %s454 = scalar_lea.vmem [#allocation2], 24
    %v455 = vld [vmem:[%s454] sm:$0xff]
    %v457 = vsel %vm207, %v452, 0
    %459 = vmatprep.subr.mxu0 0.0
    %460 = vmatpush1.msra.mxu0 %v216
    %461 = vmatprep.subr.mxu0 0.0
    %462 = vmatpush1.msra.mxu0 %v217
    %463 = vmatprep.subr.mxu0 0.0
    %464 = vmatpush1.msra.mxu0 %v218
    %465 = vmatprep.subr.mxu0 0.0
    %466 = vmatpush1.msra.mxu0 %v219
    %467 = vmatprep.subr.mxu0 0.0
    %468 = vmatpush1.msra.mxu0 0.0
    %469 = vmatprep.subr.mxu0 0.0
    %470 = vmatpush1.msra.mxu0 0.0
    %471 = vmatprep.subr.mxu0 0.0
    %472 = vmatpush1.msra.mxu0 0.0
    %473 = vmatprep.subr.mxu0 0.0
    %474 = vmatpush1.msra.mxu0 0.0
    %475 = vmatprep.subr.mxu0 0.0
    %476 = vmatpush1.msra.mxu0 0.0
    %477 = vmatprep.subr.mxu0 0.0
    %478 = vmatpush1.msra.mxu0 0.0
    %479 = vmatprep.subr.mxu0 0.0
    %480 = vmatpush1.msra.mxu0 0.0
    %481 = vmatprep.subr.mxu0 0.0
    %482 = vmatpush1.msra.mxu0 0.0
    %483 = vmatprep.subr.mxu0 0.0
    %484 = vmatpush1.msra.mxu0 0.0
    %485 = vmatprep.subr.mxu0 0.0
    %486 = vmatpush1.msra.mxu0 0.0
    %487 = vmatprep.subr.mxu0 0.0
    %488 = vmatpush1.msra.mxu0 0.0
    %489 = vmatprep.subr.mxu0 0.0
    %490 = vmatpush1.msra.mxu0 0.0
    %491 = vmatprep.subr.mxu0 0.0
    %492 = vmatpush1.msra.mxu0 0.0
    %493 = vmatprep.subr.mxu0 0.0
    %494 = vmatpush1.msra.mxu0 0.0
    %495 = vmatprep.subr.mxu0 0.0
    %496 = vmatpush1.msra.mxu0 0.0
    %497 = vmatprep.subr.mxu0 0.0
    %498 = vmatpush1.msra.mxu0 0.0
    %499 = vmatprep.subr.mxu0 0.0
    %500 = vmatpush1.msra.mxu0 0.0
    %501 = vmatprep.subr.mxu0 0.0
    %502 = vmatpush1.msra.mxu0 0.0
    %503 = vmatprep.subr.mxu0 0.0
    %504 = vmatpush1.msra.mxu0 0.0
    %505 = vmatprep.subr.mxu0 0.0
    %506 = vmatpush1.msra.mxu0 0.0
    %507 = vmatprep.subr.mxu0 0.0
    %508 = vmatpush1.msra.mxu0 0.0
    %509 = vmatprep.subr.mxu0 0.0
    %510 = vmatpush1.msra.mxu0 0.0
    %511 = vmatprep.subr.mxu0 0.0
    %512 = vmatpush1.msra.mxu0 0.0
    %513 = vmatprep.subr.mxu0 0.0
    %514 = vmatpush1.msra.mxu0 0.0
    %515 = vmatprep.subr.mxu0 0.0
    %516 = vmatpush1.msra.mxu0 0.0
    %517 = vmatprep.subr.mxu0 0.0
    %518 = vmatpush1.msra.mxu0 0.0
    %519 = vmatprep.subr.mxu0 0.0
    %520 = vmatpush1.msra.mxu0 0.0
    %521 = vmatprep.subr.mxu0 0.0
    %522 = vmatpush1.msra.mxu0 0.0
    %523 = vmatprep.mubr.f32.mxu0 0.0
    %524 = vmatmul.mubr.f32.gmra.mrb[0].mxu0 %v457
    %v525 = vpop.f32.mrb[0].mxu0
    %v526 = vadd.f32 0.0, %v525
    %v527 = vpop.f32.mrb[0].mxu0
    %528 = vdwg.mxu0
    %v529 = vadd.f32 %v455, %v526
    %v530 = vtanh.pop %v529
    %531 = vst.msk [vmem:[%s454] sm:$0xff] %vm207, %v530
    %s532 = scalar_lea.vmem [#allocation2], 32
    %v533 = vld [vmem:[%s532] sm:$0xff]
    %v535 = vsel %vm207, %v530, 0
    %537 = vmatprep.subr.mxu0 0.0
    %538 = vmatpush1.msra.mxu0 %v216
    %539 = vmatprep.subr.mxu0 0.0
    %540 = vmatpush1.msra.mxu0 %v217
    %541 = vmatprep.subr.mxu0 0.0
    %542 = vmatpush1.msra.mxu0 %v218
    %543 = vmatprep.subr.mxu0 0.0
    %544 = vmatpush1.msra.mxu0 %v219
    %545 = vmatprep.subr.mxu0 0.0
    %546 = vmatpush1.msra.mxu0 0.0
    %547 = vmatprep.subr.mxu0 0.0
    %548 = vmatpush1.msra.mxu0 0.0
    %549 = vmatprep.subr.mxu0 0.0
    %550 = vmatpush1.msra.mxu0 0.0
    %551 = vmatprep.subr.mxu0 0.0
    %552 = vmatpush1.msra.mxu0 0.0
    %553 = vmatprep.subr.mxu0 0.0
    %554 = vmatpush1.msra.mxu0 0.0
    %555 = vmatprep.subr.mxu0 0.0
    %556 = vmatpush1.msra.mxu0 0.0
    %557 = vmatprep.subr.mxu0 0.0
    %558 = vmatpush1.msra.mxu0 0.0
    %559 = vmatprep.subr.mxu0 0.0
    %560 = vmatpush1.msra.mxu0 0.0
    %561 = vmatprep.subr.mxu0 0.0
    %562 = vmatpush1.msra.mxu0 0.0
    %563 = vmatprep.subr.mxu0 0.0
    %564 = vmatpush1.msra.mxu0 0.0
    %565 = vmatprep.subr.mxu0 0.0
    %566 = vmatpush1.msra.mxu0 0.0
    %567 = vmatprep.subr.mxu0 0.0
    %568 = vmatpush1.msra.mxu0 0.0
    %569 = vmatprep.subr.mxu0 0.0
    %570 = vmatpush1.msra.mxu0 0.0
    %571 = vmatprep.subr.mxu0 0.0
    %572 = vmatpush1.msra.mxu0 0.0
    %573 = vmatprep.subr.mxu0 0.0
    %574 = vmatpush1.msra.mxu0 0.0
    %575 = vmatprep.subr.mxu0 0.0
    %576 = vmatpush1.msra.mxu0 0.0
    %577 = vmatprep.subr.mxu0 0.0
    %578 = vmatpush1.msra.mxu0 0.0
    %579 = vmatprep.subr.mxu0 0.0
    %580 = vmatpush1.msra.mxu0 0.0
    %581 = vmatprep.subr.mxu0 0.0
    %582 = vmatpush1.msra.mxu0 0.0
    %583 = vmatprep.subr.mxu0 0.0
    %584 = vmatpush1.msra.mxu0 0.0
    %585 = vmatprep.subr.mxu0 0.0
    %586 = vmatpush1.msra.mxu0 0.0
    %587 = vmatprep.subr.mxu0 0.0
    %588 = vmatpush1.msra.mxu0 0.0
    %589 = vmatprep.subr.mxu0 0.0
    %590 = vmatpush1.msra.mxu0 0.0
    %591 = vmatprep.subr.mxu0 0.0
    %592 = vmatpush1.msra.mxu0 0.0
    %593 = vmatprep.subr.mxu0 0.0
    %594 = vmatpush1.msra.mxu0 0.0
    %595 = vmatprep.subr.mxu0 0.0
    %596 = vmatpush1.msra.mxu0 0.0
    %597 = vmatprep.subr.mxu0 0.0
    %598 = vmatpush1.msra.mxu0 0.0
    %599 = vmatprep.subr.mxu0 0.0
    %600 = vmatpush1.msra.mxu0 0.0
    %601 = vmatprep.mubr.f32.mxu0 0.0
    %602 = vmatmul.mubr.f32.gmra.mrb[0].mxu0 %v535
    %v603 = vpop.f32.mrb[0].mxu0
    %v604 = vadd.f32 0.0, %v603
    %v605 = vpop.f32.mrb[0].mxu0
    %606 = vdwg.mxu0
    %v607 = vadd.f32 %v533, %v604
    %v608 = vtanh.pop %v607
    %609 = vst.msk [vmem:[%s532] sm:$0xff] %vm207, %v608
    %s610 = scalar_lea.vmem [#allocation2], 40
    %v611 = vld [vmem:[%s610] sm:$0xff]
    %v613 = vsel %vm207, %v608, 0
    %615 = vmatprep.subr.mxu0 0.0
    %616 = vmatpush1.msra.mxu0 %v216
    %617 = vmatprep.subr.mxu0 0.0
    %618 = vmatpush1.msra.mxu0 %v217
    %619 = vmatprep.subr.mxu0 0.0
    %620 = vmatpush1.msra.mxu0 %v218
    %621 = vmatprep.subr.mxu0 0.0
    %622 = vmatpush1.msra.mxu0 %v219
    %623 = vmatprep.subr.mxu0 0.0
    %624 = vmatpush1.msra.mxu0 0.0
    %625 = vmatprep.subr.mxu0 0.0
    %626 = vmatpush1.msra.mxu0 0.0
    %627 = vmatprep.subr.mxu0 0.0
    %628 = vmatpush1.msra.mxu0 0.0
    %629 = vmatprep.subr.mxu0 0.0
    %630 = vmatpush1.msra.mxu0 0.0
    %631 = vmatprep.subr.mxu0 0.0
    %632 = vmatpush1.msra.mxu0 0.0
    %633 = vmatprep.subr.mxu0 0.0
    %634 = vmatpush1.msra.mxu0 0.0
    %635 = vmatprep.subr.mxu0 0.0
    %636 = vmatpush1.msra.mxu0 0.0
    %637 = vmatprep.subr.mxu0 0.0
    %638 = vmatpush1.msra.mxu0 0.0
    %639 = vmatprep.subr.mxu0 0.0
    %640 = vmatpush1.msra.mxu0 0.0
    %641 = vmatprep.subr.mxu0 0.0
    %642 = vmatpush1.msra.mxu0 0.0
    %643 = vmatprep.subr.mxu0 0.0
    %644 = vmatpush1.msra.mxu0 0.0
    %645 = vmatprep.subr.mxu0 0.0
    %646 = vmatpush1.msra.mxu0 0.0
    %647 = vmatprep.subr.mxu0 0.0
    %648 = vmatpush1.msra.mxu0 0.0
    %649 = vmatprep.subr.mxu0 0.0
    %650 = vmatpush1.msra.mxu0 0.0
    %651 = vmatprep.subr.mxu0 0.0
    %652 = vmatpush1.msra.mxu0 0.0
    %653 = vmatprep.subr.mxu0 0.0
    %654 = vmatpush1.msra.mxu0 0.0
    %655 = vmatprep.subr.mxu0 0.0
    %656 = vmatpush1.msra.mxu0 0.0
    %657 = vmatprep.subr.mxu0 0.0
    %658 = vmatpush1.msra.mxu0 0.0
    %659 = vmatprep.subr.mxu0 0.0
    %660 = vmatpush1.msra.mxu0 0.0
    %661 = vmatprep.subr.mxu0 0.0
    %662 = vmatpush1.msra.mxu0 0.0
    %663 = vmatprep.subr.mxu0 0.0
    %664 = vmatpush1.msra.mxu0 0.0
    %665 = vmatprep.subr.mxu0 0.0
    %666 = vmatpush1.msra.mxu0 0.0
    %667 = vmatprep.subr.mxu0 0.0
    %668 = vmatpush1.msra.mxu0 0.0
    %669 = vmatprep.subr.mxu0 0.0
    %670 = vmatpush1.msra.mxu0 0.0
    %671 = vmatprep.subr.mxu0 0.0
    %672 = vmatpush1.msra.mxu0 0.0
    %673 = vmatprep.subr.mxu0 0.0
    %674 = vmatpush1.msra.mxu0 0.0
    %675 = vmatprep.subr.mxu0 0.0
    %676 = vmatpush1.msra.mxu0 0.0
    %677 = vmatprep.subr.mxu0 0.0
    %678 = vmatpush1.msra.mxu0 0.0
    %679 = vmatprep.mubr.f32.mxu0 0.0
    %680 = vmatmul.mubr.f32.gmra.mrb[0].mxu0 %v613
    %v681 = vpop.f32.mrb[0].mxu0
    %v682 = vadd.f32 0.0, %v681
    %v683 = vpop.f32.mrb[0].mxu0
    %684 = vdwg.mxu0
    %v685 = vadd.f32 %v611, %v682
    %v686 = vtanh.pop %v685
    %687 = vst.msk [vmem:[%s610] sm:$0xff] %vm207, %v686
    %s688 = scalar_lea.vmem [#allocation2], 48
    %v689 = vld [vmem:[%s688] sm:$0xff]
    %v691 = vsel %vm207, %v686, 0
    %693 = vmatprep.subr.mxu0 0.0
    %694 = vmatpush1.msra.mxu0 %v216
    %695 = vmatprep.subr.mxu0 0.0
    %696 = vmatpush1.msra.mxu0 %v217
    %697 = vmatprep.subr.mxu0 0.0
    %698 = vmatpush1.msra.mxu0 %v218
    %699 = vmatprep.subr.mxu0 0.0
    %700 = vmatpush1.msra.mxu0 %v219
    %701 = vmatprep.subr.mxu0 0.0
    %702 = vmatpush1.msra.mxu0 0.0
    %703 = vmatprep.subr.mxu0 0.0
    %704 = vmatpush1.msra.mxu0 0.0
    %705 = vmatprep.subr.mxu0 0.0
    %706 = vmatpush1.msra.mxu0 0.0
    %707 = vmatprep.subr.mxu0 0.0
    %708 = vmatpush1.msra.mxu0 0.0
    %709 = vmatprep.subr.mxu0 0.0
    %710 = vmatpush1.msra.mxu0 0.0
    %711 = vmatprep.subr.mxu0 0.0
    %712 = vmatpush1.msra.mxu0 0.0
    %713 = vmatprep.subr.mxu0 0.0
    %714 = vmatpush1.msra.mxu0 0.0
    %715 = vmatprep.subr.mxu0 0.0
    %716 = vmatpush1.msra.mxu0 0.0
    %717 = vmatprep.subr.mxu0 0.0
    %718 = vmatpush1.msra.mxu0 0.0
    %719 = vmatprep.subr.mxu0 0.0
    %720 = vmatpush1.msra.mxu0 0.0
    %721 = vmatprep.subr.mxu0 0.0
    %722 = vmatpush1.msra.mxu0 0.0
    %723 = vmatprep.subr.mxu0 0.0
    %724 = vmatpush1.msra.mxu0 0.0
    %725 = vmatprep.subr.mxu0 0.0
    %726 = vmatpush1.msra.mxu0 0.0
    %727 = vmatprep.subr.mxu0 0.0
    %728 = vmatpush1.msra.mxu0 0.0
    %729 = vmatprep.subr.mxu0 0.0
    %730 = vmatpush1.msra.mxu0 0.0
    %731 = vmatprep.subr.mxu0 0.0
    %732 = vmatpush1.msra.mxu0 0.0
    %733 = vmatprep.subr.mxu0 0.0
    %734 = vmatpush1.msra.mxu0 0.0
    %735 = vmatprep.subr.mxu0 0.0
    %736 = vmatpush1.msra.mxu0 0.0
    %737 = vmatprep.subr.mxu0 0.0
    %738 = vmatpush1.msra.mxu0 0.0
    %739 = vmatprep.subr.mxu0 0.0
    %740 = vmatpush1.msra.mxu0 0.0
    %741 = vmatprep.subr.mxu0 0.0
    %742 = vmatpush1.msra.mxu0 0.0
    %743 = vmatprep.subr.mxu0 0.0
    %744 = vmatpush1.msra.mxu0 0.0
    %745 = vmatprep.subr.mxu0 0.0
    %746 = vmatpush1.msra.mxu0 0.0
    %747 = vmatprep.subr.mxu0 0.0
    %748 = vmatpush1.msra.mxu0 0.0
    %749 = vmatprep.subr.mxu0 0.0
    %750 = vmatpush1.msra.mxu0 0.0
    %751 = vmatprep.subr.mxu0 0.0
    %752 = vmatpush1.msra.mxu0 0.0
    %753 = vmatprep.subr.mxu0 0.0
    %754 = vmatpush1.msra.mxu0 0.0
    %755 = vmatprep.subr.mxu0 0.0
    %756 = vmatpush1.msra.mxu0 0.0
    %757 = vmatprep.mubr.f32.mxu0 0.0
    %758 = vmatmul.mubr.f32.gmra.mrb[0].mxu0 %v691
    %v759 = vpop.f32.mrb[0].mxu0
    %v760 = vadd.f32 0.0, %v759
    %v761 = vpop.f32.mrb[0].mxu0
    %762 = vdwg.mxu0
    %v763 = vadd.f32 %v689, %v760
    %v764 = vtanh.pop %v763
    %765 = vst.msk [vmem:[%s688] sm:$0xff] %vm207, %v764
    %s766 = scalar_lea.vmem [#allocation2], 56
    %v767 = vld [vmem:[%s766] sm:$0xff]
    %v769 = vsel %vm207, %v764, 0
    %771 = vmatprep.subr.mxu0 0.0
    %772 = vmatpush1.msra.mxu0 %v216
    %773 = vmatprep.subr.mxu0 0.0
    %774 = vmatpush1.msra.mxu0 %v217
    %775 = vmatprep.subr.mxu0 0.0
    %776 = vmatpush1.msra.mxu0 %v218
    %777 = vmatprep.subr.mxu0 0.0
    %778 = vmatpush1.msra.mxu0 %v219
    %779 = vmatprep.subr.mxu0 0.0
    %780 = vmatpush1.msra.mxu0 0.0
    %781 = vmatprep.subr.mxu0 0.0
    %782 = vmatpush1.msra.mxu0 0.0
    %783 = vmatprep.subr.mxu0 0.0
    %784 = vmatpush1.msra.mxu0 0.0
    %785 = vmatprep.subr.mxu0 0.0
    %786 = vmatpush1.msra.mxu0 0.0
    %787 = vmatprep.subr.mxu0 0.0
    %788 = vmatpush1.msra.mxu0 0.0
    %789 = vmatprep.subr.mxu0 0.0
    %790 = vmatpush1.msra.mxu0 0.0
    %791 = vmatprep.subr.mxu0 0.0
    %792 = vmatpush1.msra.mxu0 0.0
    %793 = vmatprep.subr.mxu0 0.0
    %794 = vmatpush1.msra.mxu0 0.0
    %795 = vmatprep.subr.mxu0 0.0
    %796 = vmatpush1.msra.mxu0 0.0
    %797 = vmatprep.subr.mxu0 0.0
    %798 = vmatpush1.msra.mxu0 0.0
    %799 = vmatprep.subr.mxu0 0.0
    %800 = vmatpush1.msra.mxu0 0.0
    %801 = vmatprep.subr.mxu0 0.0
    %802 = vmatpush1.msra.mxu0 0.0
    %803 = vmatprep.subr.mxu0 0.0
    %804 = vmatpush1.msra.mxu0 0.0
    %805 = vmatprep.subr.mxu0 0.0
    %806 = vmatpush1.msra.mxu0 0.0
    %807 = vmatprep.subr.mxu0 0.0
    %808 = vmatpush1.msra.mxu0 0.0
    %809 = vmatprep.subr.mxu0 0.0
    %810 = vmatpush1.msra.mxu0 0.0
    %811 = vmatprep.subr.mxu0 0.0
    %812 = vmatpush1.msra.mxu0 0.0
    %813 = vmatprep.subr.mxu0 0.0
    %814 = vmatpush1.msra.mxu0 0.0
    %815 = vmatprep.subr.mxu0 0.0
    %816 = vmatpush1.msra.mxu0 0.0
    %817 = vmatprep.subr.mxu0 0.0
    %818 = vmatpush1.msra.mxu0 0.0
    %819 = vmatprep.subr.mxu0 0.0
    %820 = vmatpush1.msra.mxu0 0.0
    %821 = vmatprep.subr.mxu0 0.0
    %822 = vmatpush1.msra.mxu0 0.0
    %823 = vmatprep.subr.mxu0 0.0
    %824 = vmatpush1.msra.mxu0 0.0
    %825 = vmatprep.subr.mxu0 0.0
    %826 = vmatpush1.msra.mxu0 0.0
    %827 = vmatprep.subr.mxu0 0.0
    %828 = vmatpush1.msra.mxu0 0.0
    %829 = vmatprep.subr.mxu0 0.0
    %830 = vmatpush1.msra.mxu0 0.0
    %831 = vmatprep.subr.mxu0 0.0
    %832 = vmatpush1.msra.mxu0 0.0
    %833 = vmatprep.subr.mxu0 0.0
    %834 = vmatpush1.msra.mxu0 0.0
    %835 = vmatprep.mubr.f32.mxu0 0.0
    %836 = vmatmul.mubr.f32.gmra.mrb[0].mxu0 %v769
    %v837 = vpop.f32.mrb[0].mxu0
    %v838 = vadd.f32 0.0, %v837
    %v839 = vpop.f32.mrb[0].mxu0
    %840 = vdwg.mxu0
    %v841 = vadd.f32 %v767, %v838
    %v842 = vtanh.pop %v841
    %843 = vst.msk [vmem:[%s766] sm:$0xff] %vm207, %v842
    %844 = vst.msk [vmem:[#allocation8] sm:$0xff] %vm207, %v842
    %v845 = vld [vmem:[#allocation2] sm:$0xff]
    %v846 = vld [vmem:[#allocation2 + $0x8] sm:$0xff]
    %v847 = vld [vmem:[#allocation2 + $0x10] sm:$0xff]
    %v848 = vld [vmem:[#allocation2 + $0x18] sm:$0xff]
    %v849 = vld [vmem:[#allocation2 + $0x20] sm:$0xff]
    %v850 = vld [vmem:[#allocation2 + $0x28] sm:$0xff]
    %v851 = vld [vmem:[#allocation2 + $0x30] sm:$0xff]
    %v852 = vld [vmem:[#allocation2 + $0x38] sm:$0xff]
    %s853 = scalar_lea.vmem %s3, 32
    %v854 = vld [vmem:[%s853] sm:$0xff]
    %v855 = vld [vmem:[%s853 + $0x8] sm:$0xff]
    %v856 = vld [vmem:[%s853 + $0x10] sm:$0xff]
    %v857 = vld [vmem:[%s853 + $0x18] sm:$0xff]
    %s858 = scalar_lea.vmem %s4, 1
    %v859 = vld [vmem:[%s858] sm:$0x1]
    %v861 = vlaneseq
    %v862 = vshrl.u32 %v861, 7
    %v863 = vsub.s32 0, %v862
    %v864 = vrot.slane %v859, %v863
    %v867 = vsel %vm207, %v845, 0
    %v870 = vsel %vm207, %v846, 0
    %v873 = vsel %vm207, %v847, 0
    %v876 = vsel %vm207, %v848, 0
    %v879 = vsel %vm207, %v849, 0
    %v882 = vsel %vm207, %v850, 0
    %v885 = vsel %vm207, %v851, 0
    %v888 = vsel %vm207, %v852, 0
    %890 = vmatprep.subr.mxu0 0.0
    %891 = vmatpush1.msra.mxu0 %v854
    %892 = vmatprep.subr.mxu0 0.0
    %893 = vmatpush1.msra.mxu0 %v855
    %894 = vmatprep.subr.mxu0 0.0
    %895 = vmatpush1.msra.mxu0 %v856
    %896 = vmatprep.subr.mxu0 0.0
    %897 = vmatpush1.msra.mxu0 %v857
    %898 = vmatprep.subr.mxu0 0.0
    %899 = vmatpush1.msra.mxu0 0.0
    %900 = vmatprep.subr.mxu0 0.0
    %901 = vmatpush1.msra.mxu0 0.0
    %902 = vmatprep.subr.mxu0 0.0
    %903 = vmatpush1.msra.mxu0 0.0
    %904 = vmatprep.subr.mxu0 0.0
    %905 = vmatpush1.msra.mxu0 0.0
    %906 = vmatprep.subr.mxu0 0.0
    %907 = vmatpush1.msra.mxu0 0.0
    %908 = vmatprep.subr.mxu0 0.0
    %909 = vmatpush1.msra.mxu0 0.0
    %910 = vmatprep.subr.mxu0 0.0
    %911 = vmatpush1.msra.mxu0 0.0
    %912 = vmatprep.subr.mxu0 0.0
    %913 = vmatpush1.msra.mxu0 0.0
    %914 = vmatprep.subr.mxu0 0.0
    %915 = vmatpush1.msra.mxu0 0.0
    %916 = vmatprep.subr.mxu0 0.0
    %917 = vmatpush1.msra.mxu0 0.0
    %918 = vmatprep.subr.mxu0 0.0
    %919 = vmatpush1.msra.mxu0 0.0
    %920 = vmatprep.subr.mxu0 0.0
    %921 = vmatpush1.msra.mxu0 0.0
    %922 = vmatprep.subr.mxu0 0.0
    %923 = vmatpush1.msra.mxu0 0.0
    %924 = vmatprep.subr.mxu0 0.0
    %925 = vmatpush1.msra.mxu0 0.0
    %926 = vmatprep.subr.mxu0 0.0
    %927 = vmatpush1.msra.mxu0 0.0
    %928 = vmatprep.subr.mxu0 0.0
    %929 = vmatpush1.msra.mxu0 0.0
    %930 = vmatprep.subr.mxu0 0.0
    %931 = vmatpush1.msra.mxu0 0.0
    %932 = vmatprep.subr.mxu0 0.0
    %933 = vmatpush1.msra.mxu0 0.0
    %934 = vmatprep.subr.mxu0 0.0
    %935 = vmatpush1.msra.mxu0 0.0
    %936 = vmatprep.subr.mxu0 0.0
    %937 = vmatpush1.msra.mxu0 0.0
    %938 = vmatprep.subr.mxu0 0.0
    %939 = vmatpush1.msra.mxu0 0.0
    %940 = vmatprep.subr.mxu0 0.0
    %941 = vmatpush1.msra.mxu0 0.0
    %942 = vmatprep.subr.mxu0 0.0
    %943 = vmatpush1.msra.mxu0 0.0
    %944 = vmatprep.subr.mxu0 0.0
    %945 = vmatpush1.msra.mxu0 0.0
    %946 = vmatprep.subr.mxu0 0.0
    %947 = vmatpush1.msra.mxu0 0.0
    %948 = vmatprep.subr.mxu0 0.0
    %949 = vmatpush1.msra.mxu0 0.0
    %950 = vmatprep.subr.mxu0 0.0
    %951 = vmatpush1.msra.mxu0 0.0
    %952 = vmatprep.subr.mxu0 0.0
    %953 = vmatpush1.msra.mxu0 0.0
    %954 = vmatprep.mubr.f32.mxu0 0.0
    %955 = vmatmul.mubr.f32.gmra.mrb[0].mxu0 %v867
    %v956 = vpop.f32.mrb[0].mxu0
    %v957 = vadd.f32 %v864, %v956
    %v958 = vpop.f32.mrb[0].mxu0
    %959 = vmatprep.mubr.f32.mxu0 0.0
    %960 = vmatmul.mubr.f32.gmra.mrb[0].mxu0 %v870
    %v961 = vpop.f32.mrb[0].mxu0
    %v962 = vadd.f32 %v864, %v961
    %v963 = vpop.f32.mrb[0].mxu0
    %964 = vmatprep.mubr.f32.mxu0 0.0
    %965 = vmatmul.mubr.f32.gmra.mrb[0].mxu0 %v873
    %v966 = vpop.f32.mrb[0].mxu0
    %v967 = vadd.f32 %v864, %v966
    %v968 = vpop.f32.mrb[0].mxu0
    %969 = vmatprep.mubr.f32.mxu0 0.0
    %970 = vmatmul.mubr.f32.gmra.mrb[0].mxu0 %v876
    %v971 = vpop.f32.mrb[0].mxu0
    %v972 = vadd.f32 %v864, %v971
    %v973 = vpop.f32.mrb[0].mxu0
    %974 = vmatprep.mubr.f32.mxu0 0.0
    %975 = vmatmul.mubr.f32.gmra.mrb[0].mxu0 %v879
    %v976 = vpop.f32.mrb[0].mxu0
    %v977 = vadd.f32 %v864, %v976
    %v978 = vpop.f32.mrb[0].mxu0
    %979 = vmatprep.mubr.f32.mxu0 0.0
    %980 = vmatmul.mubr.f32.gmra.mrb[0].mxu0 %v882
    %v981 = vpop.f32.mrb[0].mxu0
    %v982 = vadd.f32 %v864, %v981
    %v983 = vpop.f32.mrb[0].mxu0
    %984 = vmatprep.mubr.f32.mxu0 0.0
    %985 = vmatmul.mubr.f32.gmra.mrb[0].mxu0 %v885
    %v986 = vpop.f32.mrb[0].mxu0
    %v987 = vadd.f32 %v864, %v986
    %v988 = vpop.f32.mrb[0].mxu0
    %989 = vmatprep.mubr.f32.mxu0 0.0
    %990 = vmatmul.mubr.f32.gmra.mrb[0].mxu0 %v888
    %v991 = vpop.f32.mrb[0].mxu0
    %v992 = vadd.f32 %v864, %v991
    %v993 = vpop.f32.mrb[0].mxu0
    %994 = vdwg.mxu0
    %995 = vst.msk [vmem:[#allocation2] sm:$0xff] %vm207, %v957
    %996 = vst.msk [vmem:[#allocation2 + $0x8] sm:$0xff] %vm207, %v962
    %997 = vst.msk [vmem:[#allocation2 + $0x10] sm:$0xff] %vm207, %v967
    %998 = vst.msk [vmem:[#allocation2 + $0x18] sm:$0xff] %vm207, %v972
    %999 = vst.msk [vmem:[#allocation2 + $0x20] sm:$0xff] %vm207, %v977
    %1000 = vst.msk [vmem:[#allocation2 + $0x28] sm:$0xff] %vm207, %v982
    %1001 = vst.msk [vmem:[#allocation2 + $0x30] sm:$0xff] %vm207, %v987
    %1002 = vst.msk [vmem:[#allocation2 + $0x38] sm:$0xff] %vm207, %v992
    %s1003 = scalar_lea.vmem %s5, 32
    %v1004 = vld [vmem:[%s1003] sm:$0xff]
    %v1005 = vld [vmem:[%s1003 + $0x8] sm:$0xff]
    %v1006 = vld [vmem:[%s1003 + $0x10] sm:$0xff]
    %v1007 = vld [vmem:[%s1003 + $0x18] sm:$0xff]
    %s1008 = scalar_lea.vmem [#allocation3], 8
    %v1009 = vld [vmem:[%s1008] sm:$0xff]
    %v1010 = vld [vmem:[#allocation2] sm:$0xff]
    %v1012 = vsel %vm207, %v1009, 0
    %1014 = vmatprep.subr.mxu0 0.0
    %1015 = vmatpush1.msra.mxu0 %v1004
    %1016 = vmatprep.subr.mxu0 0.0
    %1017 = vmatpush1.msra.mxu0 %v1005
    %1018 = vmatprep.subr.mxu0 0.0
    %1019 = vmatpush1.msra.mxu0 %v1006
    %1020 = vmatprep.subr.mxu0 0.0
    %1021 = vmatpush1.msra.mxu0 %v1007
    %1022 = vmatprep.subr.mxu0 0.0
    %1023 = vmatpush1.msra.mxu0 0.0
    %1024 = vmatprep.subr.mxu0 0.0
    %1025 = vmatpush1.msra.mxu0 0.0
    %1026 = vmatprep.subr.mxu0 0.0
    %1027 = vmatpush1.msra.mxu0 0.0
    %1028 = vmatprep.subr.mxu0 0.0
    %1029 = vmatpush1.msra.mxu0 0.0
    %1030 = vmatprep.subr.mxu0 0.0
    %1031 = vmatpush1.msra.mxu0 0.0
    %1032 = vmatprep.subr.mxu0 0.0
    %1033 = vmatpush1.msra.mxu0 0.0
    %1034 = vmatprep.subr.mxu0 0.0
    %1035 = vmatpush1.msra.mxu0 0.0
    %1036 = vmatprep.subr.mxu0 0.0
    %1037 = vmatpush1.msra.mxu0 0.0
    %1038 = vmatprep.subr.mxu0 0.0
    %1039 = vmatpush1.msra.mxu0 0.0
    %1040 = vmatprep.subr.mxu0 0.0
    %1041 = vmatpush1.msra.mxu0 0.0
    %1042 = vmatprep.subr.mxu0 0.0
    %1043 = vmatpush1.msra.mxu0 0.0
    %1044 = vmatprep.subr.mxu0 0.0
    %1045 = vmatpush1.msra.mxu0 0.0
    %1046 = vmatprep.subr.mxu0 0.0
    %1047 = vmatpush1.msra.mxu0 0.0
    %1048 = vmatprep.subr.mxu0 0.0
    %1049 = vmatpush1.msra.mxu0 0.0
    %1050 = vmatprep.subr.mxu0 0.0
    %1051 = vmatpush1.msra.mxu0 0.0
    %1052 = vmatprep.subr.mxu0 0.0
    %1053 = vmatpush1.msra.mxu0 0.0
    %1054 = vmatprep.subr.mxu0 0.0
    %1055 = vmatpush1.msra.mxu0 0.0
    %1056 = vmatprep.subr.mxu0 0.0
    %1057 = vmatpush1.msra.mxu0 0.0
    %1058 = vmatprep.subr.mxu0 0.0
    %1059 = vmatpush1.msra.mxu0 0.0
    %1060 = vmatprep.subr.mxu0 0.0
    %1061 = vmatpush1.msra.mxu0 0.0
    %1062 = vmatprep.subr.mxu0 0.0
    %1063 = vmatpush1.msra.mxu0 0.0
    %1064 = vmatprep.subr.mxu0 0.0
    %1065 = vmatpush1.msra.mxu0 0.0
    %1066 = vmatprep.subr.mxu0 0.0
    %1067 = vmatpush1.msra.mxu0 0.0
    %1068 = vmatprep.subr.mxu0 0.0
    %1069 = vmatpush1.msra.mxu0 0.0
    %1070 = vmatprep.subr.mxu0 0.0
    %1071 = vmatpush1.msra.mxu0 0.0
    %1072 = vmatprep.subr.mxu0 0.0
    %1073 = vmatpush1.msra.mxu0 0.0
    %1074 = vmatprep.subr.mxu0 0.0
    %1075 = vmatpush1.msra.mxu0 0.0
    %1076 = vmatprep.subr.mxu0 0.0
    %1077 = vmatpush1.msra.mxu0 0.0
    %1078 = vmatprep.mubr.f32.mxu0 0.0
    %1079 = vmatmul.mubr.f32.gmra.mrb[0].mxu0 %v1012
    %v1080 = vpop.f32.mrb[0].mxu0
    %v1081 = vadd.f32 0.0, %v1080
    %v1082 = vpop.f32.mrb[0].mxu0
    %1083 = vdwg.mxu0
    %v1084 = vadd.f32 %v1010, %v1081
    %v1085 = vtanh.pop %v1084
    %1086 = vst.msk [vmem:[#allocation2] sm:$0xff] %vm207, %v1085
    %v1087 = vld [vmem:[%s298] sm:$0xff]
    %v1089 = vsel %vm207, %v1085, 0
    %1091 = vmatprep.subr.mxu0 0.0
    %1092 = vmatpush1.msra.mxu0 %v1004
    %1093 = vmatprep.subr.mxu0 0.0
    %1094 = vmatpush1.msra.mxu0 %v1005
    %1095 = vmatprep.subr.mxu0 0.0
    %1096 = vmatpush1.msra.mxu0 %v1006
    %1097 = vmatprep.subr.mxu0 0.0
    %1098 = vmatpush1.msra.mxu0 %v1007
    %1099 = vmatprep.subr.mxu0 0.0
    %1100 = vmatpush1.msra.mxu0 0.0
    %1101 = vmatprep.subr.mxu0 0.0
    %1102 = vmatpush1.msra.mxu0 0.0
    %1103 = vmatprep.subr.mxu0 0.0
    %1104 = vmatpush1.msra.mxu0 0.0
    %1105 = vmatprep.subr.mxu0 0.0
    %1106 = vmatpush1.msra.mxu0 0.0
    %1107 = vmatprep.subr.mxu0 0.0
    %1108 = vmatpush1.msra.mxu0 0.0
    %1109 = vmatprep.subr.mxu0 0.0
    %1110 = vmatpush1.msra.mxu0 0.0
    %1111 = vmatprep.subr.mxu0 0.0
    %1112 = vmatpush1.msra.mxu0 0.0
    %1113 = vmatprep.subr.mxu0 0.0
    %1114 = vmatpush1.msra.mxu0 0.0
    %1115 = vmatprep.subr.mxu0 0.0
    %1116 = vmatpush1.msra.mxu0 0.0
    %1117 = vmatprep.subr.mxu0 0.0
    %1118 = vmatpush1.msra.mxu0 0.0
    %1119 = vmatprep.subr.mxu0 0.0
    %1120 = vmatpush1.msra.mxu0 0.0
    %1121 = vmatprep.subr.mxu0 0.0
    %1122 = vmatpush1.msra.mxu0 0.0
    %1123 = vmatprep.subr.mxu0 0.0
    %1124 = vmatpush1.msra.mxu0 0.0
    %1125 = vmatprep.subr.mxu0 0.0
    %1126 = vmatpush1.msra.mxu0 0.0
    %1127 = vmatprep.subr.mxu0 0.0
    %1128 = vmatpush1.msra.mxu0 0.0
    %1129 = vmatprep.subr.mxu0 0.0
    %1130 = vmatpush1.msra.mxu0 0.0
    %1131 = vmatprep.subr.mxu0 0.0
    %1132 = vmatpush1.msra.mxu0 0.0
    %1133 = vmatprep.subr.mxu0 0.0
    %1134 = vmatpush1.msra.mxu0 0.0
    %1135 = vmatprep.subr.mxu0 0.0
    %1136 = vmatpush1.msra.mxu0 0.0
    %1137 = vmatprep.subr.mxu0 0.0
    %1138 = vmatpush1.msra.mxu0 0.0
    %1139 = vmatprep.subr.mxu0 0.0
    %1140 = vmatpush1.msra.mxu0 0.0
    %1141 = vmatprep.subr.mxu0 0.0
    %1142 = vmatpush1.msra.mxu0 0.0
    %1143 = vmatprep.subr.mxu0 0.0
    %1144 = vmatpush1.msra.mxu0 0.0
    %1145 = vmatprep.subr.mxu0 0.0
    %1146 = vmatpush1.msra.mxu0 0.0
    %1147 = vmatprep.subr.mxu0 0.0
    %1148 = vmatpush1.msra.mxu0 0.0
    %1149 = vmatprep.subr.mxu0 0.0
    %1150 = vmatpush1.msra.mxu0 0.0
    %1151 = vmatprep.subr.mxu0 0.0
    %1152 = vmatpush1.msra.mxu0 0.0
    %1153 = vmatprep.subr.mxu0 0.0
    %1154 = vmatpush1.msra.mxu0 0.0
    %1155 = vmatprep.mubr.f32.mxu0 0.0
    %1156 = vmatmul.mubr.f32.gmra.mrb[0].mxu0 %v1089
    %v1157 = vpop.f32.mrb[0].mxu0
    %v1158 = vadd.f32 0.0, %v1157
    %v1159 = vpop.f32.mrb[0].mxu0
    %1160 = vdwg.mxu0
    %v1161 = vadd.f32 %v1087, %v1158
    %v1162 = vtanh.pop %v1161
    %1163 = vst.msk [vmem:[%s298] sm:$0xff] %vm207, %v1162
    %v1164 = vld [vmem:[%s376] sm:$0xff]
    %v1166 = vsel %vm207, %v1162, 0
    %1168 = vmatprep.subr.mxu0 0.0
    %1169 = vmatpush1.msra.mxu0 %v1004
    %1170 = vmatprep.subr.mxu0 0.0
    %1171 = vmatpush1.msra.mxu0 %v1005
    %1172 = vmatprep.subr.mxu0 0.0
    %1173 = vmatpush1.msra.mxu0 %v1006
    %1174 = vmatprep.subr.mxu0 0.0
    %1175 = vmatpush1.msra.mxu0 %v1007
    %1176 = vmatprep.subr.mxu0 0.0
    %1177 = vmatpush1.msra.mxu0 0.0
    %1178 = vmatprep.subr.mxu0 0.0
    %1179 = vmatpush1.msra.mxu0 0.0
    %1180 = vmatprep.subr.mxu0 0.0
    %1181 = vmatpush1.msra.mxu0 0.0
    %1182 = vmatprep.subr.mxu0 0.0
    %1183 = vmatpush1.msra.mxu0 0.0
    %1184 = vmatprep.subr.mxu0 0.0
    %1185 = vmatpush1.msra.mxu0 0.0
    %1186 = vmatprep.subr.mxu0 0.0
    %1187 = vmatpush1.msra.mxu0 0.0
    %1188 = vmatprep.subr.mxu0 0.0
    %1189 = vmatpush1.msra.mxu0 0.0
    %1190 = vmatprep.subr.mxu0 0.0
    %1191 = vmatpush1.msra.mxu0 0.0
    %1192 = vmatprep.subr.mxu0 0.0
    %1193 = vmatpush1.msra.mxu0 0.0
    %1194 = vmatprep.subr.mxu0 0.0
    %1195 = vmatpush1.msra.mxu0 0.0
    %1196 = vmatprep.subr.mxu0 0.0
    %1197 = vmatpush1.msra.mxu0 0.0
    %1198 = vmatprep.subr.mxu0 0.0
    %1199 = vmatpush1.msra.mxu0 0.0
    %1200 = vmatprep.subr.mxu0 0.0
    %1201 = vmatpush1.msra.mxu0 0.0
    %1202 = vmatprep.subr.mxu0 0.0
    %1203 = vmatpush1.msra.mxu0 0.0
    %1204 = vmatprep.subr.mxu0 0.0
    %1205 = vmatpush1.msra.mxu0 0.0
    %1206 = vmatprep.subr.mxu0 0.0
    %1207 = vmatpush1.msra.mxu0 0.0
    %1208 = vmatprep.subr.mxu0 0.0
    %1209 = vmatpush1.msra.mxu0 0.0
    %1210 = vmatprep.subr.mxu0 0.0
    %1211 = vmatpush1.msra.mxu0 0.0
    %1212 = vmatprep.subr.mxu0 0.0
    %1213 = vmatpush1.msra.mxu0 0.0
    %1214 = vmatprep.subr.mxu0 0.0
    %1215 = vmatpush1.msra.mxu0 0.0
    %1216 = vmatprep.subr.mxu0 0.0
    %1217 = vmatpush1.msra.mxu0 0.0
    %1218 = vmatprep.subr.mxu0 0.0
    %1219 = vmatpush1.msra.mxu0 0.0
    %1220 = vmatprep.subr.mxu0 0.0
    %1221 = vmatpush1.msra.mxu0 0.0
    %1222 = vmatprep.subr.mxu0 0.0
    %1223 = vmatpush1.msra.mxu0 0.0
    %1224 = vmatprep.subr.mxu0 0.0
    %1225 = vmatpush1.msra.mxu0 0.0
    %1226 = vmatprep.subr.mxu0 0.0
    %1227 = vmatpush1.msra.mxu0 0.0
    %1228 = vmatprep.subr.mxu0 0.0
    %1229 = vmatpush1.msra.mxu0 0.0
    %1230 = vmatprep.subr.mxu0 0.0
    %1231 = vmatpush1.msra.mxu0 0.0
    %1232 = vmatprep.mubr.f32.mxu0 0.0
    %1233 = vmatmul.mubr.f32.gmra.mrb[0].mxu0 %v1166
    %v1234 = vpop.f32.mrb[0].mxu0
    %v1235 = vadd.f32 0.0, %v1234
    %v1236 = vpop.f32.mrb[0].mxu0
    %1237 = vdwg.mxu0
    %v1238 = vadd.f32 %v1164, %v1235
    %v1239 = vtanh.pop %v1238
    %1240 = vst.msk [vmem:[%s376] sm:$0xff] %vm207, %v1239
    %v1241 = vld [vmem:[%s454] sm:$0xff]
    %v1243 = vsel %vm207, %v1239, 0
    %1245 = vmatprep.subr.mxu0 0.0
    %1246 = vmatpush1.msra.mxu0 %v1004
    %1247 = vmatprep.subr.mxu0 0.0
    %1248 = vmatpush1.msra.mxu0 %v1005
    %1249 = vmatprep.subr.mxu0 0.0
    %1250 = vmatpush1.msra.mxu0 %v1006
    %1251 = vmatprep.subr.mxu0 0.0
    %1252 = vmatpush1.msra.mxu0 %v1007
    %1253 = vmatprep.subr.mxu0 0.0
    %1254 = vmatpush1.msra.mxu0 0.0
    %1255 = vmatprep.subr.mxu0 0.0
    %1256 = vmatpush1.msra.mxu0 0.0
    %1257 = vmatprep.subr.mxu0 0.0
    %1258 = vmatpush1.msra.mxu0 0.0
    %1259 = vmatprep.subr.mxu0 0.0
    %1260 = vmatpush1.msra.mxu0 0.0
    %1261 = vmatprep.subr.mxu0 0.0
    %1262 = vmatpush1.msra.mxu0 0.0
    %1263 = vmatprep.subr.mxu0 0.0
    %1264 = vmatpush1.msra.mxu0 0.0
    %1265 = vmatprep.subr.mxu0 0.0
    %1266 = vmatpush1.msra.mxu0 0.0
    %1267 = vmatprep.subr.mxu0 0.0
    %1268 = vmatpush1.msra.mxu0 0.0
    %1269 = vmatprep.subr.mxu0 0.0
    %1270 = vmatpush1.msra.mxu0 0.0
    %1271 = vmatprep.subr.mxu0 0.0
    %1272 = vmatpush1.msra.mxu0 0.0
    %1273 = vmatprep.subr.mxu0 0.0
    %1274 = vmatpush1.msra.mxu0 0.0
    %1275 = vmatprep.subr.mxu0 0.0
    %1276 = vmatpush1.msra.mxu0 0.0
    %1277 = vmatprep.subr.mxu0 0.0
    %1278 = vmatpush1.msra.mxu0 0.0
    %1279 = vmatprep.subr.mxu0 0.0
    %1280 = vmatpush1.msra.mxu0 0.0
    %1281 = vmatprep.subr.mxu0 0.0
    %1282 = vmatpush1.msra.mxu0 0.0
    %1283 = vmatprep.subr.mxu0 0.0
    %1284 = vmatpush1.msra.mxu0 0.0
    %1285 = vmatprep.subr.mxu0 0.0
    %1286 = vmatpush1.msra.mxu0 0.0
    %1287 = vmatprep.subr.mxu0 0.0
    %1288 = vmatpush1.msra.mxu0 0.0
    %1289 = vmatprep.subr.mxu0 0.0
    %1290 = vmatpush1.msra.mxu0 0.0
    %1291 = vmatprep.subr.mxu0 0.0
    %1292 = vmatpush1.msra.mxu0 0.0
    %1293 = vmatprep.subr.mxu0 0.0
    %1294 = vmatpush1.msra.mxu0 0.0
    %1295 = vmatprep.subr.mxu0 0.0
    %1296 = vmatpush1.msra.mxu0 0.0
    %1297 = vmatprep.subr.mxu0 0.0
    %1298 = vmatpush1.msra.mxu0 0.0
    %1299 = vmatprep.subr.mxu0 0.0
    %1300 = vmatpush1.msra.mxu0 0.0
    %1301 = vmatprep.subr.mxu0 0.0
    %1302 = vmatpush1.msra.mxu0 0.0
    %1303 = vmatprep.subr.mxu0 0.0
    %1304 = vmatpush1.msra.mxu0 0.0
    %1305 = vmatprep.subr.mxu0 0.0
    %1306 = vmatpush1.msra.mxu0 0.0
    %1307 = vmatprep.subr.mxu0 0.0
    %1308 = vmatpush1.msra.mxu0 0.0
    %1309 = vmatprep.mubr.f32.mxu0 0.0
    %1310 = vmatmul.mubr.f32.gmra.mrb[0].mxu0 %v1243
    %v1311 = vpop.f32.mrb[0].mxu0
    %v1312 = vadd.f32 0.0, %v1311
    %v1313 = vpop.f32.mrb[0].mxu0
    %1314 = vdwg.mxu0
    %v1315 = vadd.f32 %v1241, %v1312
    %v1316 = vtanh.pop %v1315
    %1317 = vst.msk [vmem:[%s454] sm:$0xff] %vm207, %v1316
    %v1318 = vld [vmem:[%s532] sm:$0xff]
    %v1320 = vsel %vm207, %v1316, 0
    %1322 = vmatprep.subr.mxu0 0.0
    %1323 = vmatpush1.msra.mxu0 %v1004
    %1324 = vmatprep.subr.mxu0 0.0
    %1325 = vmatpush1.msra.mxu0 %v1005
    %1326 = vmatprep.subr.mxu0 0.0
    %1327 = vmatpush1.msra.mxu0 %v1006
    %1328 = vmatprep.subr.mxu0 0.0
    %1329 = vmatpush1.msra.mxu0 %v1007
    %1330 = vmatprep.subr.mxu0 0.0
    %1331 = vmatpush1.msra.mxu0 0.0
    %1332 = vmatprep.subr.mxu0 0.0
    %1333 = vmatpush1.msra.mxu0 0.0
    %1334 = vmatprep.subr.mxu0 0.0
    %1335 = vmatpush1.msra.mxu0 0.0
    %1336 = vmatprep.subr.mxu0 0.0
    %1337 = vmatpush1.msra.mxu0 0.0
    %1338 = vmatprep.subr.mxu0 0.0
    %1339 = vmatpush1.msra.mxu0 0.0
    %1340 = vmatprep.subr.mxu0 0.0
    %1341 = vmatpush1.msra.mxu0 0.0
    %1342 = vmatprep.subr.mxu0 0.0
    %1343 = vmatpush1.msra.mxu0 0.0
    %1344 = vmatprep.subr.mxu0 0.0
    %1345 = vmatpush1.msra.mxu0 0.0
    %1346 = vmatprep.subr.mxu0 0.0
    %1347 = vmatpush1.msra.mxu0 0.0
    %1348 = vmatprep.subr.mxu0 0.0
    %1349 = vmatpush1.msra.mxu0 0.0
    %1350 = vmatprep.subr.mxu0 0.0
    %1351 = vmatpush1.msra.mxu0 0.0
    %1352 = vmatprep.subr.mxu0 0.0
    %1353 = vmatpush1.msra.mxu0 0.0
    %1354 = vmatprep.subr.mxu0 0.0
    %1355 = vmatpush1.msra.mxu0 0.0
    %1356 = vmatprep.subr.mxu0 0.0
    %1357 = vmatpush1.msra.mxu0 0.0
    %1358 = vmatprep.subr.mxu0 0.0
    %1359 = vmatpush1.msra.mxu0 0.0
    %1360 = vmatprep.subr.mxu0 0.0
    %1361 = vmatpush1.msra.mxu0 0.0
    %1362 = vmatprep.subr.mxu0 0.0
    %1363 = vmatpush1.msra.mxu0 0.0
    %1364 = vmatprep.subr.mxu0 0.0
    %1365 = vmatpush1.msra.mxu0 0.0
    %1366 = vmatprep.subr.mxu0 0.0
    %1367 = vmatpush1.msra.mxu0 0.0
    %1368 = vmatprep.subr.mxu0 0.0
    %1369 = vmatpush1.msra.mxu0 0.0
    %1370 = vmatprep.subr.mxu0 0.0
    %1371 = vmatpush1.msra.mxu0 0.0
    %1372 = vmatprep.subr.mxu0 0.0
    %1373 = vmatpush1.msra.mxu0 0.0
    %1374 = vmatprep.subr.mxu0 0.0
    %1375 = vmatpush1.msra.mxu0 0.0
    %1376 = vmatprep.subr.mxu0 0.0
    %1377 = vmatpush1.msra.mxu0 0.0
    %1378 = vmatprep.subr.mxu0 0.0
    %1379 = vmatpush1.msra.mxu0 0.0
    %1380 = vmatprep.subr.mxu0 0.0
    %1381 = vmatpush1.msra.mxu0 0.0
    %1382 = vmatprep.subr.mxu0 0.0
    %1383 = vmatpush1.msra.mxu0 0.0
    %1384 = vmatprep.subr.mxu0 0.0
    %1385 = vmatpush1.msra.mxu0 0.0
    %1386 = vmatprep.mubr.f32.mxu0 0.0
    %1387 = vmatmul.mubr.f32.gmra.mrb[0].mxu0 %v1320
    %v1388 = vpop.f32.mrb[0].mxu0
    %v1389 = vadd.f32 0.0, %v1388
    %v1390 = vpop.f32.mrb[0].mxu0
    %1391 = vdwg.mxu0
    %v1392 = vadd.f32 %v1318, %v1389
    %v1393 = vtanh.pop %v1392
    %1394 = vst.msk [vmem:[%s532] sm:$0xff] %vm207, %v1393
    %v1395 = vld [vmem:[%s610] sm:$0xff]
    %v1397 = vsel %vm207, %v1393, 0
    %1399 = vmatprep.subr.mxu0 0.0
    %1400 = vmatpush1.msra.mxu0 %v1004
    %1401 = vmatprep.subr.mxu0 0.0
    %1402 = vmatpush1.msra.mxu0 %v1005
    %1403 = vmatprep.subr.mxu0 0.0
    %1404 = vmatpush1.msra.mxu0 %v1006
    %1405 = vmatprep.subr.mxu0 0.0
    %1406 = vmatpush1.msra.mxu0 %v1007
    %1407 = vmatprep.subr.mxu0 0.0
    %1408 = vmatpush1.msra.mxu0 0.0
    %1409 = vmatprep.subr.mxu0 0.0
    %1410 = vmatpush1.msra.mxu0 0.0
    %1411 = vmatprep.subr.mxu0 0.0
    %1412 = vmatpush1.msra.mxu0 0.0
    %1413 = vmatprep.subr.mxu0 0.0
    %1414 = vmatpush1.msra.mxu0 0.0
    %1415 = vmatprep.subr.mxu0 0.0
    %1416 = vmatpush1.msra.mxu0 0.0
    %1417 = vmatprep.subr.mxu0 0.0
    %1418 = vmatpush1.msra.mxu0 0.0
    %1419 = vmatprep.subr.mxu0 0.0
    %1420 = vmatpush1.msra.mxu0 0.0
    %1421 = vmatprep.subr.mxu0 0.0
    %1422 = vmatpush1.msra.mxu0 0.0
    %1423 = vmatprep.subr.mxu0 0.0
    %1424 = vmatpush1.msra.mxu0 0.0
    %1425 = vmatprep.subr.mxu0 0.0
    %1426 = vmatpush1.msra.mxu0 0.0
    %1427 = vmatprep.subr.mxu0 0.0
    %1428 = vmatpush1.msra.mxu0 0.0
    %1429 = vmatprep.subr.mxu0 0.0
    %1430 = vmatpush1.msra.mxu0 0.0
    %1431 = vmatprep.subr.mxu0 0.0
    %1432 = vmatpush1.msra.mxu0 0.0
    %1433 = vmatprep.subr.mxu0 0.0
    %1434 = vmatpush1.msra.mxu0 0.0
    %1435 = vmatprep.subr.mxu0 0.0
    %1436 = vmatpush1.msra.mxu0 0.0
    %1437 = vmatprep.subr.mxu0 0.0
    %1438 = vmatpush1.msra.mxu0 0.0
    %1439 = vmatprep.subr.mxu0 0.0
    %1440 = vmatpush1.msra.mxu0 0.0
    %1441 = vmatprep.subr.mxu0 0.0
    %1442 = vmatpush1.msra.mxu0 0.0
    %1443 = vmatprep.subr.mxu0 0.0
    %1444 = vmatpush1.msra.mxu0 0.0
    %1445 = vmatprep.subr.mxu0 0.0
    %1446 = vmatpush1.msra.mxu0 0.0
    %1447 = vmatprep.subr.mxu0 0.0
    %1448 = vmatpush1.msra.mxu0 0.0
    %1449 = vmatprep.subr.mxu0 0.0
    %1450 = vmatpush1.msra.mxu0 0.0
    %1451 = vmatprep.subr.mxu0 0.0
    %1452 = vmatpush1.msra.mxu0 0.0
    %1453 = vmatprep.subr.mxu0 0.0
    %1454 = vmatpush1.msra.mxu0 0.0
    %1455 = vmatprep.subr.mxu0 0.0
    %1456 = vmatpush1.msra.mxu0 0.0
    %1457 = vmatprep.subr.mxu0 0.0
    %1458 = vmatpush1.msra.mxu0 0.0
    %1459 = vmatprep.subr.mxu0 0.0
    %1460 = vmatpush1.msra.mxu0 0.0
    %1461 = vmatprep.subr.mxu0 0.0
    %1462 = vmatpush1.msra.mxu0 0.0
    %1463 = vmatprep.mubr.f32.mxu0 0.0
    %1464 = vmatmul.mubr.f32.gmra.mrb[0].mxu0 %v1397
    %v1465 = vpop.f32.mrb[0].mxu0
    %v1466 = vadd.f32 0.0, %v1465
    %v1467 = vpop.f32.mrb[0].mxu0
    %1468 = vdwg.mxu0
    %v1469 = vadd.f32 %v1395, %v1466
    %v1470 = vtanh.pop %v1469
    %1471 = vst.msk [vmem:[%s610] sm:$0xff] %vm207, %v1470
    %v1472 = vld [vmem:[%s688] sm:$0xff]
    %v1474 = vsel %vm207, %v1470, 0
    %1476 = vmatprep.subr.mxu0 0.0
    %1477 = vmatpush1.msra.mxu0 %v1004
    %1478 = vmatprep.subr.mxu0 0.0
    %1479 = vmatpush1.msra.mxu0 %v1005
    %1480 = vmatprep.subr.mxu0 0.0
    %1481 = vmatpush1.msra.mxu0 %v1006
    %1482 = vmatprep.subr.mxu0 0.0
    %1483 = vmatpush1.msra.mxu0 %v1007
    %1484 = vmatprep.subr.mxu0 0.0
    %1485 = vmatpush1.msra.mxu0 0.0
    %1486 = vmatprep.subr.mxu0 0.0
    %1487 = vmatpush1.msra.mxu0 0.0
    %1488 = vmatprep.subr.mxu0 0.0
    %1489 = vmatpush1.msra.mxu0 0.0
    %1490 = vmatprep.subr.mxu0 0.0
    %1491 = vmatpush1.msra.mxu0 0.0
    %1492 = vmatprep.subr.mxu0 0.0
    %1493 = vmatpush1.msra.mxu0 0.0
    %1494 = vmatprep.subr.mxu0 0.0
    %1495 = vmatpush1.msra.mxu0 0.0
    %1496 = vmatprep.subr.mxu0 0.0
    %1497 = vmatpush1.msra.mxu0 0.0
    %1498 = vmatprep.subr.mxu0 0.0
    %1499 = vmatpush1.msra.mxu0 0.0
    %1500 = vmatprep.subr.mxu0 0.0
    %1501 = vmatpush1.msra.mxu0 0.0
    %1502 = vmatprep.subr.mxu0 0.0
    %1503 = vmatpush1.msra.mxu0 0.0
    %1504 = vmatprep.subr.mxu0 0.0
    %1505 = vmatpush1.msra.mxu0 0.0
    %1506 = vmatprep.subr.mxu0 0.0
    %1507 = vmatpush1.msra.mxu0 0.0
    %1508 = vmatprep.subr.mxu0 0.0
    %1509 = vmatpush1.msra.mxu0 0.0
    %1510 = vmatprep.subr.mxu0 0.0
    %1511 = vmatpush1.msra.mxu0 0.0
    %1512 = vmatprep.subr.mxu0 0.0
    %1513 = vmatpush1.msra.mxu0 0.0
    %1514 = vmatprep.subr.mxu0 0.0
    %1515 = vmatpush1.msra.mxu0 0.0
    %1516 = vmatprep.subr.mxu0 0.0
    %1517 = vmatpush1.msra.mxu0 0.0
    %1518 = vmatprep.subr.mxu0 0.0
    %1519 = vmatpush1.msra.mxu0 0.0
    %1520 = vmatprep.subr.mxu0 0.0
    %1521 = vmatpush1.msra.mxu0 0.0
    %1522 = vmatprep.subr.mxu0 0.0
    %1523 = vmatpush1.msra.mxu0 0.0
    %1524 = vmatprep.subr.mxu0 0.0
    %1525 = vmatpush1.msra.mxu0 0.0
    %1526 = vmatprep.subr.mxu0 0.0
    %1527 = vmatpush1.msra.mxu0 0.0
    %1528 = vmatprep.subr.mxu0 0.0
    %1529 = vmatpush1.msra.mxu0 0.0
    %1530 = vmatprep.subr.mxu0 0.0
    %1531 = vmatpush1.msra.mxu0 0.0
    %1532 = vmatprep.subr.mxu0 0.0
    %1533 = vmatpush1.msra.mxu0 0.0
    %1534 = vmatprep.subr.mxu0 0.0
    %1535 = vmatpush1.msra.mxu0 0.0
    %1536 = vmatprep.subr.mxu0 0.0
    %1537 = vmatpush1.msra.mxu0 0.0
    %1538 = vmatprep.subr.mxu0 0.0
    %1539 = vmatpush1.msra.mxu0 0.0
    %1540 = vmatprep.mubr.f32.mxu0 0.0
    %1541 = vmatmul.mubr.f32.gmra.mrb[0].mxu0 %v1474
    %v1542 = vpop.f32.mrb[0].mxu0
    %v1543 = vadd.f32 0.0, %v1542
    %v1544 = vpop.f32.mrb[0].mxu0
    %1545 = vdwg.mxu0
    %v1546 = vadd.f32 %v1472, %v1543
    %v1547 = vtanh.pop %v1546
    %1548 = vst.msk [vmem:[%s688] sm:$0xff] %vm207, %v1547
    %v1549 = vld [vmem:[%s766] sm:$0xff]
    %v1551 = vsel %vm207, %v1547, 0
    %1553 = vmatprep.subr.mxu0 0.0
    %1554 = vmatpush1.msra.mxu0 %v1004
    %1555 = vmatprep.subr.mxu0 0.0
    %1556 = vmatpush1.msra.mxu0 %v1005
    %1557 = vmatprep.subr.mxu0 0.0
    %1558 = vmatpush1.msra.mxu0 %v1006
    %1559 = vmatprep.subr.mxu0 0.0
    %1560 = vmatpush1.msra.mxu0 %v1007
    %1561 = vmatprep.subr.mxu0 0.0
    %1562 = vmatpush1.msra.mxu0 0.0
    %1563 = vmatprep.subr.mxu0 0.0
    %1564 = vmatpush1.msra.mxu0 0.0
    %1565 = vmatprep.subr.mxu0 0.0
    %1566 = vmatpush1.msra.mxu0 0.0
    %1567 = vmatprep.subr.mxu0 0.0
    %1568 = vmatpush1.msra.mxu0 0.0
    %1569 = vmatprep.subr.mxu0 0.0
    %1570 = vmatpush1.msra.mxu0 0.0
    %1571 = vmatprep.subr.mxu0 0.0
    %1572 = vmatpush1.msra.mxu0 0.0
    %1573 = vmatprep.subr.mxu0 0.0
    %1574 = vmatpush1.msra.mxu0 0.0
    %1575 = vmatprep.subr.mxu0 0.0
    %1576 = vmatpush1.msra.mxu0 0.0
    %1577 = vmatprep.subr.mxu0 0.0
    %1578 = vmatpush1.msra.mxu0 0.0
    %1579 = vmatprep.subr.mxu0 0.0
    %1580 = vmatpush1.msra.mxu0 0.0
    %1581 = vmatprep.subr.mxu0 0.0
    %1582 = vmatpush1.msra.mxu0 0.0
    %1583 = vmatprep.subr.mxu0 0.0
    %1584 = vmatpush1.msra.mxu0 0.0
    %1585 = vmatprep.subr.mxu0 0.0
    %1586 = vmatpush1.msra.mxu0 0.0
    %1587 = vmatprep.subr.mxu0 0.0
    %1588 = vmatpush1.msra.mxu0 0.0
    %1589 = vmatprep.subr.mxu0 0.0
    %1590 = vmatpush1.msra.mxu0 0.0
    %1591 = vmatprep.subr.mxu0 0.0
    %1592 = vmatpush1.msra.mxu0 0.0
    %1593 = vmatprep.subr.mxu0 0.0
    %1594 = vmatpush1.msra.mxu0 0.0
    %1595 = vmatprep.subr.mxu0 0.0
    %1596 = vmatpush1.msra.mxu0 0.0
    %1597 = vmatprep.subr.mxu0 0.0
    %1598 = vmatpush1.msra.mxu0 0.0
    %1599 = vmatprep.subr.mxu0 0.0
    %1600 = vmatpush1.msra.mxu0 0.0
    %1601 = vmatprep.subr.mxu0 0.0
    %1602 = vmatpush1.msra.mxu0 0.0
    %1603 = vmatprep.subr.mxu0 0.0
    %1604 = vmatpush1.msra.mxu0 0.0
    %1605 = vmatprep.subr.mxu0 0.0
    %1606 = vmatpush1.msra.mxu0 0.0
    %1607 = vmatprep.subr.mxu0 0.0
    %1608 = vmatpush1.msra.mxu0 0.0
    %1609 = vmatprep.subr.mxu0 0.0
    %1610 = vmatpush1.msra.mxu0 0.0
    %1611 = vmatprep.subr.mxu0 0.0
    %1612 = vmatpush1.msra.mxu0 0.0
    %1613 = vmatprep.subr.mxu0 0.0
    %1614 = vmatpush1.msra.mxu0 0.0
    %1615 = vmatprep.subr.mxu0 0.0
    %1616 = vmatpush1.msra.mxu0 0.0
    %1617 = vmatprep.mubr.f32.mxu0 0.0
    %1618 = vmatmul.mubr.f32.gmra.mrb[0].mxu0 %v1551
    %v1619 = vpop.f32.mrb[0].mxu0
    %v1620 = vadd.f32 0.0, %v1619
    %v1621 = vpop.f32.mrb[0].mxu0
    %1622 = vdwg.mxu0
    %v1623 = vadd.f32 %v1549, %v1620
    %v1624 = vtanh.pop %v1623
    %1625 = vst.msk [vmem:[%s766] sm:$0xff] %vm207, %v1624
    %s1626 = scalar_lea.vmem [#allocation8], 8
    %1627 = vst.msk [vmem:[%s1626] sm:$0xff] %vm207, %v1624
    %v1628 = vld [vmem:[#allocation2] sm:$0xff]
    %v1629 = vld [vmem:[#allocation2 + $0x8] sm:$0xff]
    %v1630 = vld [vmem:[#allocation2 + $0x10] sm:$0xff]
    %v1631 = vld [vmem:[#allocation2 + $0x18] sm:$0xff]
    %v1632 = vld [vmem:[#allocation2 + $0x20] sm:$0xff]
    %v1633 = vld [vmem:[#allocation2 + $0x28] sm:$0xff]
    %v1634 = vld [vmem:[#allocation2 + $0x30] sm:$0xff]
    %v1635 = vld [vmem:[#allocation2 + $0x38] sm:$0xff]
    %v1636 = vld [vmem:[%s6] sm:$0xff]
    %v1637 = vld [vmem:[%s6 + $0x8] sm:$0xff]
    %v1638 = vld [vmem:[%s6 + $0x10] sm:$0xff]
    %v1639 = vld [vmem:[%s6 + $0x18] sm:$0xff]
    %v1640 = vld [vmem:[%s7] sm:$0x1]
    %v1642 = vlaneseq
    %v1643 = vshrl.u32 %v1642, 7
    %v1644 = vsub.s32 0, %v1643
    %v1645 = vrot.slane %v1640, %v1644
    %v1648 = vsel %vm207, %v1628, 0
    %v1651 = vsel %vm207, %v1629, 0
    %v1654 = vsel %vm207, %v1630, 0
    %v1657 = vsel %vm207, %v1631, 0
    %v1660 = vsel %vm207, %v1632, 0
    %v1663 = vsel %vm207, %v1633, 0
    %v1666 = vsel %vm207, %v1634, 0
    %v1669 = vsel %vm207, %v1635, 0
    %1671 = vmatprep.subr.mxu0 0.0
    %1672 = vmatpush1.msra.mxu0 %v1636
    %1673 = vmatprep.subr.mxu0 0.0
    %1674 = vmatpush1.msra.mxu0 %v1637
    %1675 = vmatprep.subr.mxu0 0.0
    %1676 = vmatpush1.msra.mxu0 %v1638
    %1677 = vmatprep.subr.mxu0 0.0
    %1678 = vmatpush1.msra.mxu0 %v1639
    %1679 = vmatprep.subr.mxu0 0.0
    %1680 = vmatpush1.msra.mxu0 0.0
    %1681 = vmatprep.subr.mxu0 0.0
    %1682 = vmatpush1.msra.mxu0 0.0
    %1683 = vmatprep.subr.mxu0 0.0
    %1684 = vmatpush1.msra.mxu0 0.0
    %1685 = vmatprep.subr.mxu0 0.0
    %1686 = vmatpush1.msra.mxu0 0.0
    %1687 = vmatprep.subr.mxu0 0.0
    %1688 = vmatpush1.msra.mxu0 0.0
    %1689 = vmatprep.subr.mxu0 0.0
    %1690 = vmatpush1.msra.mxu0 0.0
    %1691 = vmatprep.subr.mxu0 0.0
    %1692 = vmatpush1.msra.mxu0 0.0
    %1693 = vmatprep.subr.mxu0 0.0
    %1694 = vmatpush1.msra.mxu0 0.0
    %1695 = vmatprep.subr.mxu0 0.0
    %1696 = vmatpush1.msra.mxu0 0.0
    %1697 = vmatprep.subr.mxu0 0.0
    %1698 = vmatpush1.msra.mxu0 0.0
    %1699 = vmatprep.subr.mxu0 0.0
    %1700 = vmatpush1.msra.mxu0 0.0
    %1701 = vmatprep.subr.mxu0 0.0
    %1702 = vmatpush1.msra.mxu0 0.0
    %1703 = vmatprep.subr.mxu0 0.0
    %1704 = vmatpush1.msra.mxu0 0.0
    %1705 = vmatprep.subr.mxu0 0.0
    %1706 = vmatpush1.msra.mxu0 0.0
    %1707 = vmatprep.subr.mxu0 0.0
    %1708 = vmatpush1.msra.mxu0 0.0
    %1709 = vmatprep.subr.mxu0 0.0
    %1710 = vmatpush1.msra.mxu0 0.0
    %1711 = vmatprep.subr.mxu0 0.0
    %1712 = vmatpush1.msra.mxu0 0.0
    %1713 = vmatprep.subr.mxu0 0.0
    %1714 = vmatpush1.msra.mxu0 0.0
    %1715 = vmatprep.subr.mxu0 0.0
    %1716 = vmatpush1.msra.mxu0 0.0
    %1717 = vmatprep.subr.mxu0 0.0
    %1718 = vmatpush1.msra.mxu0 0.0
    %1719 = vmatprep.subr.mxu0 0.0
    %1720 = vmatpush1.msra.mxu0 0.0
    %1721 = vmatprep.subr.mxu0 0.0
    %1722 = vmatpush1.msra.mxu0 0.0
    %1723 = vmatprep.subr.mxu0 0.0
    %1724 = vmatpush1.msra.mxu0 0.0
    %1725 = vmatprep.subr.mxu0 0.0
    %1726 = vmatpush1.msra.mxu0 0.0
    %1727 = vmatprep.subr.mxu0 0.0
    %1728 = vmatpush1.msra.mxu0 0.0
    %1729 = vmatprep.subr.mxu0 0.0
    %1730 = vmatpush1.msra.mxu0 0.0
    %1731 = vmatprep.subr.mxu0 0.0
    %1732 = vmatpush1.msra.mxu0 0.0
    %1733 = vmatprep.subr.mxu0 0.0
    %1734 = vmatpush1.msra.mxu0 0.0
    %1735 = vmatprep.mubr.f32.mxu0 0.0
    %1736 = vmatmul.mubr.f32.gmra.mrb[0].mxu0 %v1648
    %v1737 = vpop.f32.mrb[0].mxu0
    %v1738 = vadd.f32 %v1645, %v1737
    %v1739 = vpop.f32.mrb[0].mxu0
    %1740 = vmatprep.mubr.f32.mxu0 0.0
    %1741 = vmatmul.mubr.f32.gmra.mrb[0].mxu0 %v1651
    %v1742 = vpop.f32.mrb[0].mxu0
    %v1743 = vadd.f32 %v1645, %v1742
    %v1744 = vpop.f32.mrb[0].mxu0
    %1745 = vmatprep.mubr.f32.mxu0 0.0
    %1746 = vmatmul.mubr.f32.gmra.mrb[0].mxu0 %v1654
    %v1747 = vpop.f32.mrb[0].mxu0
    %v1748 = vadd.f32 %v1645, %v1747
    %v1749 = vpop.f32.mrb[0].mxu0
    %1750 = vmatprep.mubr.f32.mxu0 0.0
    %1751 = vmatmul.mubr.f32.gmra.mrb[0].mxu0 %v1657
    %v1752 = vpop.f32.mrb[0].mxu0
    %v1753 = vadd.f32 %v1645, %v1752
    %v1754 = vpop.f32.mrb[0].mxu0
    %1755 = vmatprep.mubr.f32.mxu0 0.0
    %1756 = vmatmul.mubr.f32.gmra.mrb[0].mxu0 %v1660
    %v1757 = vpop.f32.mrb[0].mxu0
    %v1758 = vadd.f32 %v1645, %v1757
    %v1759 = vpop.f32.mrb[0].mxu0
    %1760 = vmatprep.mubr.f32.mxu0 0.0
    %1761 = vmatmul.mubr.f32.gmra.mrb[0].mxu0 %v1663
    %v1762 = vpop.f32.mrb[0].mxu0
    %v1763 = vadd.f32 %v1645, %v1762
    %v1764 = vpop.f32.mrb[0].mxu0
    %1765 = vmatprep.mubr.f32.mxu0 0.0
    %1766 = vmatmul.mubr.f32.gmra.mrb[0].mxu0 %v1666
    %v1767 = vpop.f32.mrb[0].mxu0
    %v1768 = vadd.f32 %v1645, %v1767
    %v1769 = vpop.f32.mrb[0].mxu0
    %1770 = vmatprep.mubr.f32.mxu0 0.0
    %1771 = vmatmul.mubr.f32.gmra.mrb[0].mxu0 %v1669
    %v1772 = vpop.f32.mrb[0].mxu0
    %v1773 = vadd.f32 %v1645, %v1772
    %v1774 = vpop.f32.mrb[0].mxu0
    %1775 = vdwg.mxu0
    %vm1776 = vcmask 64512
    %1777 = vst.msk [vmem:[%s8] sm:$0xff] %vm1776, %v1738
    %1778 = vst.msk [vmem:[%s8 + $0x8] sm:$0xff] %vm1776, %v1743
    %1779 = vst.msk [vmem:[%s8 + $0x10] sm:$0xff] %vm1776, %v1748
    %1780 = vst.msk [vmem:[%s8 + $0x18] sm:$0xff] %vm1776, %v1753
    %1781 = vst.msk [vmem:[%s8 + $0x20] sm:$0xff] %vm1776, %v1758
    %1782 = vst.msk [vmem:[%s8 + $0x28] sm:$0xff] %vm1776, %v1763
    %1783 = vst.msk [vmem:[%s8 + $0x30] sm:$0xff] %vm1776, %v1768
    %1784 = vst.msk [vmem:[%s8 + $0x38] sm:$0xff] %vm1776, %v1773
    // Predicated region
    $region42: #{tpu_custom_call.1} parent=1 // pred_check
      _
    $region43: #{tpu_custom_call.1} parent=1 // pred_check_branch
      %1786 = sbr.rel (0) target = $region45
    $region44: #{tpu_custom_call.1} parent=1 // pred_region
      _
    $region45: #{tpu_custom_call.1} parent=1 // pred_fallthru
      _
    // Predicated region
    $region46: #{tpu_custom_call.1} parent=1 // pred_check
      _
    $region47: #{tpu_custom_call.1} parent=1 // pred_check_branch
      %1788 = sbr.rel (0) target = $region49
    $region48: #{tpu_custom_call.1} parent=1 // pred_region
      %s1790 = ssub.s32 256, 256
      %1791 = vsyncadd [#allocation5], %s1790
      %s1792 = sshll.u32 [#allocation8], 4
      %s1793 = int_to_ptr.vmem [resolvable:$true] %s1792
      %1798 = dma.vmem_to_hbm [thread:$0]  %s1793, 256, %s9, [#allocation5], 128, 128, 8
    $region49: #{tpu_custom_call.1} parent=1 // pred_fallthru
      _
    // Predicated region
    $region50: #{tpu_custom_call.1} parent=1 // pred_check
      _
    $region51: #{tpu_custom_call.1} parent=1 // pred_check_branch
      %1800 = sbr.rel (0) target = $region53
    $region52: #{tpu_custom_call.1} parent=1 // pred_region
      _
    $region53: #{tpu_custom_call.1} parent=1 // pred_fallthru
      _
    // Predicated region
    $region54: #{tpu_custom_call.1} parent=1 // pred_check
      _
    $region55: #{tpu_custom_call.1} parent=1 // pred_check_branch
      %1802 = sbr.rel (0) target = $region57
    $region56: #{tpu_custom_call.1} parent=1 // pred_region
      %1803 = dma.done [#allocation5], 256
    $region57: #{tpu_custom_call.1} parent=1 // pred_fallthru
      _
    %1804 = vsyncpa [#allocation4], 1
    %1805 = vsyncpa [#allocation7], 1
    %1806 = vsyncpa [#allocation5], 1

</llo_original>
